<compile_context>
chip_gen: v6e
topology: v6e:2x2x1
jax: 0.10.0
libtpu: 0.0.40
codegen_flags: <defaults>
</compile_context>

<pallas_src>
import functools

import jax
import jax.numpy as jnp
from jax import lax
from jax.experimental import pallas as pl
from jax.experimental.pallas import tpu as pltpu


def _attention_kernel(q_ref, k_ref, v_ref, wp_ref, bp_ref, o_ref, cat_ref, *,
                      n_heads, n_kv_valid):
    """One grid step = (batch element b, query tile qi).

    q_ref  : (1, tq,  D)  bf16  pre-projected, pre-scaled queries for this tile
    k_ref  : (1, Nk,  D)  bf16  pre-projected keys   (Nk = N padded to mult. of 128)
    v_ref  : (1, Nk,  D)  bf16  pre-projected values
    wp_ref : (D, D)       bf16  output-projection weight, pre-transposed (invariant)
    bp_ref : (1, D)       f32   output-projection bias (invariant)
    o_ref  : (1, tq, D)         output tile
    cat_ref: (tq, D)      bf16  VMEM scratch: concatenated per-head attention outputs
    """
    dim = q_ref.shape[-1]
    head_dim = dim // n_heads
    tq = q_ref.shape[1]
    n_kv = k_ref.shape[1]

    # Key-padding mask (hoisted out of the head loop; broadcasts are not CSE'd).
    kmask = None
    if n_kv != n_kv_valid:
        kcol = lax.broadcasted_iota(jnp.int32, (tq, n_kv), 1)
        kmask = kcol < n_kv_valid

    # Note: when N % tq != 0, the padded query rows of the last tile compute a
    # softmax over whatever rows the pipeline fetched; rows are independent and
    # the output writeback of the padded region is masked, so this is safe.
    for h in range(n_heads):                                      # static, small H
        lo = h * head_dim
        qh = q_ref[0, :, lo:lo + head_dim]                        # (tq, hd) bf16
        kh = k_ref[0, :, lo:lo + head_dim]                        # (Nk, hd) bf16
        vh = v_ref[0, :, lo:lo + head_dim]                        # (Nk, hd) bf16

        # Scores: contract q/k over hd (no explicit k^T / relayout).
        s = lax.dot_general(qh, kh, (((1,), (1,)), ((), ())),
                            preferred_element_type=jnp.float32)   # (tq, Nk) f32
        if kmask is not None:
            s = jnp.where(kmask, s, jnp.float32(-1e30))           # mask padded keys

        # Softmax in f32; normalization deferred past the P@V matmul.
        m = jnp.max(s, axis=-1, keepdims=True)
        e = jnp.exp(s - m)                                        # un-normalized probs
        l = jnp.sum(e, axis=-1, keepdims=True)                    # (tq, 1)

        o_h = jnp.dot(e.astype(jnp.bfloat16), vh,
                      preferred_element_type=jnp.float32)         # (tq, hd) f32
        o_h = o_h * pl.reciprocal(l, approx=True)                 # EUP reciprocal

        # Concatenate heads into the lane-dense (tq, D) scratch (bounds live ranges).
        cat_ref[:, lo:lo + head_dim] = o_h.astype(cat_ref.dtype)

    # Single fused output projection at full MXU contraction depth (K = D).
    out = jnp.dot(cat_ref[...], wp_ref[...],
                  preferred_element_type=jnp.float32) + bp_ref[0]
    o_ref[0] = out.astype(o_ref.dtype)


def _invariant_spec(block_shape, index_map):
    """Grid-invariant block: request single buffering (no dead double-buffer copy)."""
    try:
        return pl.BlockSpec(block_shape, index_map, pipeline_mode=pl.Buffered(1))
    except TypeError:  # older BlockSpec without pipeline_mode support
        return pl.BlockSpec(block_shape, index_map)


def _tile_config(n_tokens):
    """Generation-aware query-tile cap and scoped-VMEM limit."""
    try:
        kind = jax.devices()[0].device_kind.lower()
    except Exception:  # pragma: no cover
        kind = ""
    is_v7 = "v7" in kind
    tq_cap = 256 if is_v7 else 512                 # v7x: 64 MiB VMEM -> smaller tiles
    vmem_bytes = (48 if is_v7 else 64) * 1024 * 1024
    tq = n_tokens if n_tokens <= tq_cap else tq_cap
    return tq, vmem_bytes


def attention_forward(x, w_qkv, b_qkv, w_proj, b_proj, *, n_heads,
                      attn_p=0.0, proj_p=0.0):
    """x: (B, N, D). w_qkv: (3D, D), b_qkv: (3D,), w_proj: (D, D), b_proj: (D,)."""
    assert attn_p == 0.0 and proj_p == 0.0, "dropout not implemented (p must be 0.0)"
    B, N, D = x.shape
    assert D % n_heads == 0
    scale = (D // n_heads) ** -0.5

    w_qkv = jnp.asarray(w_qkv, jnp.float32)
    b_qkv = jnp.asarray(b_qkv, jnp.float32)
    w_proj = jnp.asarray(w_proj, jnp.float32)
    b_proj = jnp.asarray(b_proj, jnp.float32)

    # ---- QKV projection hoisted out of the kernel (plain XLA GEMM). ----
    # Fold the softmax scale into the Q rows of the weight/bias (zero runtime cost).
    w_all = w_qkv.at[:D].multiply(scale)                              # (3D, D)
    b_all = b_qkv.at[:D].multiply(scale)                              # (3D,)
    x_bf16 = x.astype(jnp.bfloat16)
    qkv = jnp.einsum("bnd,fd->bnf", x_bf16, w_all.astype(jnp.bfloat16),
                     preferred_element_type=jnp.float32) + b_all      # (B, N, 3D) f32
    qkv = qkv.astype(jnp.bfloat16)
    q = qkv[..., :D]
    k = qkv[..., D:2 * D]
    v = qkv[..., 2 * D:]

    # Pad the key/value length to a lane-aligned multiple of 128 (padded keys are
    # masked with a large negative score inside the kernel).
    n_kv = ((N + 127) // 128) * 128
    if n_kv != N:
        pad = ((0, 0), (0, n_kv - N), (0, 0))
        k = jnp.pad(k, pad)
        v = jnp.pad(v, pad)

    # Output-projection params (MXU operand in bf16, bias in f32).
    w_p_t = w_proj.T.astype(jnp.bfloat16)                             # (D, D)
    b_p = b_proj.reshape(1, D)                                        # (1, D) f32

    tq, vmem_bytes = _tile_config(N)
    n_q_tiles = pl.cdiv(N, tq)

    kernel = functools.partial(_attention_kernel, n_heads=n_heads, n_kv_valid=N)

    return pl.pallas_call(
        kernel,
        out_shape=jax.ShapeDtypeStruct((B, N, D), x.dtype),
        grid_spec=pltpu.PrefetchScalarGridSpec(
            num_scalar_prefetch=0,
            grid=(B, n_q_tiles),
            in_specs=[
                pl.BlockSpec((1, tq, D), lambda b, qi: (b, qi, 0)),    # q tile
                pl.BlockSpec((1, n_kv, D), lambda b, qi: (b, 0, 0)),   # K (per batch)
                pl.BlockSpec((1, n_kv, D), lambda b, qi: (b, 0, 0)),   # V (per batch)
                _invariant_spec((D, D), lambda b, qi: (0, 0)),         # Wproj^T
                _invariant_spec((1, D), lambda b, qi: (0, 0)),         # bproj
            ],
            out_specs=pl.BlockSpec((1, tq, D), lambda b, qi: (b, qi, 0)),
            scratch_shapes=[pltpu.VMEM((tq, D), jnp.bfloat16)],        # head concat
        ),
        compiler_params=pltpu.CompilerParams(
            dimension_semantics=("parallel", "parallel"),
            vmem_limit_bytes=vmem_bytes,
        ),
    )(q, k, v, w_p_t, b_p)


def attention_reference(x, w_qkv, b_qkv, w_proj, b_proj, *, n_heads):
    """Pure-JAX f32 reference mirroring the PyTorch forward."""
    B, N, D = x.shape
    hd = D // n_heads
    scale = hd ** -0.5
    qkv = x @ w_qkv.T + b_qkv                                   # (B, N, 3D)
    qkv = qkv.reshape(B, N, 3, n_heads, hd).transpose(2, 0, 3, 1, 4)
    q, k, v = qkv[0], qkv[1], qkv[2]                            # (B, H, N, hd)
    dp = jnp.einsum("bhnd,bhmd->bhnm", q, k) * scale
    attn = jax.nn.softmax(dp, axis=-1)
    wa = jnp.einsum("bhnm,bhmd->bhnd", attn, v)                 # (B, H, N, hd)
    wa = wa.transpose(0, 2, 1, 3).reshape(B, N, D)
    return wa @ w_proj.T + b_proj


if __name__ == "__main__":
    # Small shapes consistent with the module: dim divisible by n_heads.
    B, N, D = 2, 8, 32
    n_heads = 4

    key = jax.random.PRNGKey(0)
    kx, kw1, kb1, kw2, kb2 = jax.random.split(key, 5)

    x = jax.random.normal(kx, (B, N, D), dtype=jnp.float32)
    # nn.Linear(dim, 3*dim) weight: (3D, D); nn.Linear(dim, dim) weight: (D, D).
    w_qkv = jax.random.normal(kw1, (3 * D, D), dtype=jnp.float32) * 0.05
    b_qkv = jax.random.normal(kb1, (3 * D,), dtype=jnp.float32) * 0.05
    w_proj = jax.random.normal(kw2, (D, D), dtype=jnp.float32) * 0.05
    b_proj = jax.random.normal(kb2, (D,), dtype=jnp.float32) * 0.05

    out = attention_forward(x, w_qkv, b_qkv, w_proj, b_proj, n_heads=n_heads)
    out = jax.block_until_ready(out)

    ref = attention_reference(x, w_qkv, b_qkv, w_proj, b_proj, n_heads=n_heads)
    assert out.shape == (B, N, D)
    max_err = float(jnp.max(jnp.abs(out - ref)))
    # bf16 MXU operands + approx reciprocal => compare with bf16-level tolerance.
    assert jnp.allclose(out, ref, atol=2e-2, rtol=2e-2), (
        f"mismatch vs reference, max abs err = {max_err}")

    print("KERNEL_OK")
</pallas_src>

<mosaic_0001>
module attributes {stable_mosaic.version = 11 : i64} {
  func.func @_attention_kernel(%arg0: i32, %arg1: i32, %arg2: memref<1x8x32xbf16, #tpu.memory_space<vmem>>, %arg3: memref<1x128x32xbf16, #tpu.memory_space<vmem>>, %arg4: memref<1x128x32xbf16, #tpu.memory_space<vmem>>, %arg5: memref<32x32xbf16, #tpu.memory_space<vmem>>, %arg6: memref<1x32xf32, #tpu.memory_space<vmem>>, %arg7: memref<1x8x32xf32, #tpu.memory_space<vmem>>, %arg8: memref<8x32xbf16, #tpu.memory_space<vmem>>) attributes {dimension_semantics = [#tpu.dimension_semantics<parallel>, #tpu.dimension_semantics<parallel>], iteration_bounds = array<i64: 2, 1>, scalar_prefetch = 0 : i64, scratch_operands = 1 : i64, tpu.core_type = #tpu.core_type<tc>, window_params = [{transform_indices = @transform_0, window_bounds = array<i64: 1, 8, 32>}, {transform_indices = @transform_1, window_bounds = array<i64: 1, 128, 32>}, {transform_indices = @transform_2, window_bounds = array<i64: 1, 128, 32>}, {pipeline_mode = #tpu.pipeline_mode<synchronous>, transform_indices = @transform_3, window_bounds = array<i64: 32, 32>}, {pipeline_mode = #tpu.pipeline_mode<synchronous>, transform_indices = @transform_4, window_bounds = array<i64: 1, 32>}, {transform_indices = @transform_5, window_bounds = array<i64: 1, 8, 32>}]} {
    %0 = tpu.iota {dimensions = array<i32: 1>} : vector<8x128xi32>
    %c8_i32 = arith.constant 8 : i32
    %1 = vector.broadcast %c8_i32 : i32 to vector<8x128xi32>
    %2 = arith.cmpi slt, %0, %1 : vector<8x128xi32>
    %c0 = arith.constant 0 : index
    %c0_0 = arith.constant 0 : index
    %c0_1 = arith.constant 0 : index
    %3 = vector.load %arg2[%c0, %c0_0, %c0_1] : memref<1x8x32xbf16, #tpu.memory_space<vmem>>, vector<1x8x8xbf16>
    %4 = vector.shape_cast %3 : vector<1x8x8xbf16> to vector<8x8xbf16>
    %c0_2 = arith.constant 0 : index
    %c0_3 = arith.constant 0 : index
    %c0_4 = arith.constant 0 : index
    %5 = vector.load %arg3[%c0_2, %c0_3, %c0_4] : memref<1x128x32xbf16, #tpu.memory_space<vmem>>, vector<1x128x8xbf16>
    %6 = vector.shape_cast %5 : vector<1x128x8xbf16> to vector<128x8xbf16>
    %c0_5 = arith.constant 0 : index
    %c0_6 = arith.constant 0 : index
    %c0_7 = arith.constant 0 : index
    %7 = vector.load %arg4[%c0_5, %c0_6, %c0_7] : memref<1x128x32xbf16, #tpu.memory_space<vmem>>, vector<1x128x8xbf16>
    %8 = vector.shape_cast %7 : vector<1x128x8xbf16> to vector<128x8xbf16>
    %cst = arith.constant dense<0.000000e+00> : vector<8x128xf32>
    %9 = tpu.matmul %4, %6, %cst {dimension_numbers = #tpu.dot_dimension_numbers<[1], [1], [0], [0], [0, 0, 1, 0], [], []>} : vector<8x8xbf16>, vector<128x8xbf16>, vector<8x128xf32> -> vector<8x128xf32>
    %cst_8 = arith.constant -1.000000e+30 : f32
    %10 = vector.broadcast %cst_8 : f32 to vector<8x128xf32>
    %11 = arith.select %2, %9, %10 : vector<8x128xi1>, vector<8x128xf32>
    %cst_9 = arith.constant dense<0xFF800000> : vector<8xf32>
    %12 = vector.multi_reduction <maximumf>, %11, %cst_9 [1] : vector<8x128xf32> to vector<8xf32>
    %13 = vector.shape_cast %12 : vector<8xf32> to vector<8x1xf32>
    %14 = vector.broadcast %13 : vector<8x1xf32> to vector<8x128xf32>
    %15 = arith.subf %11, %14 : vector<8x128xf32>
    %16 = math.exp %15 : vector<8x128xf32>
    %cst_10 = arith.constant dense<0.000000e+00> : vector<8xf32>
    %17 = vector.multi_reduction <add>, %16, %cst_10 [1] : vector<8x128xf32> to vector<8xf32>
    %18 = vector.shape_cast %17 : vector<8xf32> to vector<8x1xf32>
    %19 = arith.truncf %16 : vector<8x128xf32> to vector<8x128xbf16>
    %cst_11 = arith.constant dense<0.000000e+00> : vector<8x8xf32>
    %20 = tpu.matmul %19, %8, %cst_11 {dimension_numbers = #tpu.dot_dimension_numbers<[1], [0], [0], [1], [0, 0, 1, 1], [], []>} : vector<8x128xbf16>, vector<128x8xbf16>, vector<8x8xf32> -> vector<8x8xf32>
    %21 = tpu.reciprocal %18 {approx = true} : vector<8x1xf32> -> vector<8x1xf32>
    %22 = vector.broadcast %21 : vector<8x1xf32> to vector<8x8xf32>
    %23 = arith.mulf %20, %22 : vector<8x8xf32>
    %24 = arith.truncf %23 : vector<8x8xf32> to vector<8x8xbf16>
    %c0_12 = arith.constant 0 : index
    %c0_13 = arith.constant 0 : index
    %25 = vector.load %arg8[%c0_12, %c0_13] : memref<8x32xbf16, #tpu.memory_space<vmem>>, vector<8x8xbf16>
    tpu.vector_store %arg8[%c0_12, %c0_13], %24 {strides = array<i32>} : memref<8x32xbf16, #tpu.memory_space<vmem>>, vector<8x8xbf16>,
    %c0_14 = arith.constant 0 : index
    %c0_15 = arith.constant 0 : index
    %c8 = arith.constant 8 : index
    %26 = vector.load %arg2[%c0_14, %c0_15, %c8] : memref<1x8x32xbf16, #tpu.memory_space<vmem>>, vector<1x8x8xbf16>
    %27 = vector.shape_cast %26 : vector<1x8x8xbf16> to vector<8x8xbf16>
    %c0_16 = arith.constant 0 : index
    %c0_17 = arith.constant 0 : index
    %c8_18 = arith.constant 8 : index
    %28 = vector.load %arg3[%c0_16, %c0_17, %c8_18] : memref<1x128x32xbf16, #tpu.memory_space<vmem>>, vector<1x128x8xbf16>
    %29 = vector.shape_cast %28 : vector<1x128x8xbf16> to vector<128x8xbf16>
    %c0_19 = arith.constant 0 : index
    %c0_20 = arith.constant 0 : index
    %c8_21 = arith.constant 8 : index
    %30 = vector.load %arg4[%c0_19, %c0_20, %c8_21] : memref<1x128x32xbf16, #tpu.memory_space<vmem>>, vector<1x128x8xbf16>
    %31 = vector.shape_cast %30 : vector<1x128x8xbf16> to vector<128x8xbf16>
    %cst_22 = arith.constant dense<0.000000e+00> : vector<8x128xf32>
    %32 = tpu.matmul %27, %29, %cst_22 {dimension_numbers = #tpu.dot_dimension_numbers<[1], [1], [0], [0], [0, 0, 1, 0], [], []>} : vector<8x8xbf16>, vector<128x8xbf16>, vector<8x128xf32> -> vector<8x128xf32>
    %cst_23 = arith.constant -1.000000e+30 : f32
    %33 = vector.broadcast %cst_23 : f32 to vector<8x128xf32>
    %34 = arith.select %2, %32, %33 : vector<8x128xi1>, vector<8x128xf32>
    %cst_24 = arith.constant dense<0xFF800000> : vector<8xf32>
    %35 = vector.multi_reduction <maximumf>, %34, %cst_24 [1] : vector<8x128xf32> to vector<8xf32>
    %36 = vector.shape_cast %35 : vector<8xf32> to vector<8x1xf32>
    %37 = vector.broadcast %36 : vector<8x1xf32> to vector<8x128xf32>
    %38 = arith.subf %34, %37 : vector<8x128xf32>
    %39 = math.exp %38 : vector<8x128xf32>
    %cst_25 = arith.constant dense<0.000000e+00> : vector<8xf32>
    %40 = vector.multi_reduction <add>, %39, %cst_25 [1] : vector<8x128xf32> to vector<8xf32>
    %41 = vector.shape_cast %40 : vector<8xf32> to vector<8x1xf32>
    %42 = arith.truncf %39 : vector<8x128xf32> to vector<8x128xbf16>
    %cst_26 = arith.constant dense<0.000000e+00> : vector<8x8xf32>
    %43 = tpu.matmul %42, %31, %cst_26 {dimension_numbers = #tpu.dot_dimension_numbers<[1], [0], [0], [1], [0, 0, 1, 1], [], []>} : vector<8x128xbf16>, vector<128x8xbf16>, vector<8x8xf32> -> vector<8x8xf32>
    %44 = tpu.reciprocal %41 {approx = true} : vector<8x1xf32> -> vector<8x1xf32>
    %45 = vector.broadcast %44 : vector<8x1xf32> to vector<8x8xf32>
    %46 = arith.mulf %43, %45 : vector<8x8xf32>
    %47 = arith.truncf %46 : vector<8x8xf32> to vector<8x8xbf16>
    %c0_27 = arith.constant 0 : index
    %c8_28 = arith.constant 8 : index
    %48 = vector.load %arg8[%c0_27, %c8_28] : memref<8x32xbf16, #tpu.memory_space<vmem>>, vector<8x8xbf16>
    tpu.vector_store %arg8[%c0_27, %c8_28], %47 {strides = array<i32>} : memref<8x32xbf16, #tpu.memory_space<vmem>>, vector<8x8xbf16>,
    %c0_29 = arith.constant 0 : index
    %c0_30 = arith.constant 0 : index
    %c16 = arith.constant 16 : index
    %49 = vector.load %arg2[%c0_29, %c0_30, %c16] : memref<1x8x32xbf16, #tpu.memory_space<vmem>>, vector<1x8x8xbf16>
    %50 = vector.shape_cast %49 : vector<1x8x8xbf16> to vector<8x8xbf16>
    %c0_31 = arith.constant 0 : index
    %c0_32 = arith.constant 0 : index
    %c16_33 = arith.constant 16 : index
    %51 = vector.load %arg3[%c0_31, %c0_32, %c16_33] : memref<1x128x32xbf16, #tpu.memory_space<vmem>>, vector<1x128x8xbf16>
    %52 = vector.shape_cast %51 : vector<1x128x8xbf16> to vector<128x8xbf16>
    %c0_34 = arith.constant 0 : index
    %c0_35 = arith.constant 0 : index
    %c16_36 = arith.constant 16 : index
    %53 = vector.load %arg4[%c0_34, %c0_35, %c16_36] : memref<1x128x32xbf16, #tpu.memory_space<vmem>>, vector<1x128x8xbf16>
    %54 = vector.shape_cast %53 : vector<1x128x8xbf16> to vector<128x8xbf16>
    %cst_37 = arith.constant dense<0.000000e+00> : vector<8x128xf32>
    %55 = tpu.matmul %50, %52, %cst_37 {dimension_numbers = #tpu.dot_dimension_numbers<[1], [1], [0], [0], [0, 0, 1, 0], [], []>} : vector<8x8xbf16>, vector<128x8xbf16>, vector<8x128xf32> -> vector<8x128xf32>
    %cst_38 = arith.constant -1.000000e+30 : f32
    %56 = vector.broadcast %cst_38 : f32 to vector<8x128xf32>
    %57 = arith.select %2, %55, %56 : vector<8x128xi1>, vector<8x128xf32>
    %cst_39 = arith.constant dense<0xFF800000> : vector<8xf32>
    %58 = vector.multi_reduction <maximumf>, %57, %cst_39 [1] : vector<8x128xf32> to vector<8xf32>
    %59 = vector.shape_cast %58 : vector<8xf32> to vector<8x1xf32>
    %60 = vector.broadcast %59 : vector<8x1xf32> to vector<8x128xf32>
    %61 = arith.subf %57, %60 : vector<8x128xf32>
    %62 = math.exp %61 : vector<8x128xf32>
    %cst_40 = arith.constant dense<0.000000e+00> : vector<8xf32>
    %63 = vector.multi_reduction <add>, %62, %cst_40 [1] : vector<8x128xf32> to vector<8xf32>
    %64 = vector.shape_cast %63 : vector<8xf32> to vector<8x1xf32>
    %65 = arith.truncf %62 : vector<8x128xf32> to vector<8x128xbf16>
    %cst_41 = arith.constant dense<0.000000e+00> : vector<8x8xf32>
    %66 = tpu.matmul %65, %54, %cst_41 {dimension_numbers = #tpu.dot_dimension_numbers<[1], [0], [0], [1], [0, 0, 1, 1], [], []>} : vector<8x128xbf16>, vector<128x8xbf16>, vector<8x8xf32> -> vector<8x8xf32>
    %67 = tpu.reciprocal %64 {approx = true} : vector<8x1xf32> -> vector<8x1xf32>
    %68 = vector.broadcast %67 : vector<8x1xf32> to vector<8x8xf32>
    %69 = arith.mulf %66, %68 : vector<8x8xf32>
    %70 = arith.truncf %69 : vector<8x8xf32> to vector<8x8xbf16>
    %c0_42 = arith.constant 0 : index
    %c16_43 = arith.constant 16 : index
    %71 = vector.load %arg8[%c0_42, %c16_43] : memref<8x32xbf16, #tpu.memory_space<vmem>>, vector<8x8xbf16>
    tpu.vector_store %arg8[%c0_42, %c16_43], %70 {strides = array<i32>} : memref<8x32xbf16, #tpu.memory_space<vmem>>, vector<8x8xbf16>,
    %c0_44 = arith.constant 0 : index
    %c0_45 = arith.constant 0 : index
    %c24 = arith.constant 24 : index
    %72 = vector.load %arg2[%c0_44, %c0_45, %c24] : memref<1x8x32xbf16, #tpu.memory_space<vmem>>, vector<1x8x8xbf16>
    %73 = vector.shape_cast %72 : vector<1x8x8xbf16> to vector<8x8xbf16>
    %c0_46 = arith.constant 0 : index
    %c0_47 = arith.constant 0 : index
    %c24_48 = arith.constant 24 : index
    %74 = vector.load %arg3[%c0_46, %c0_47, %c24_48] : memref<1x128x32xbf16, #tpu.memory_space<vmem>>, vector<1x128x8xbf16>
    %75 = vector.shape_cast %74 : vector<1x128x8xbf16> to vector<128x8xbf16>
    %c0_49 = arith.constant 0 : index
    %c0_50 = arith.constant 0 : index
    %c24_51 = arith.constant 24 : index
    %76 = vector.load %arg4[%c0_49, %c0_50, %c24_51] : memref<1x128x32xbf16, #tpu.memory_space<vmem>>, vector<1x128x8xbf16>
    %77 = vector.shape_cast %76 : vector<1x128x8xbf16> to vector<128x8xbf16>
    %cst_52 = arith.constant dense<0.000000e+00> : vector<8x128xf32>
    %78 = tpu.matmul %73, %75, %cst_52 {dimension_numbers = #tpu.dot_dimension_numbers<[1], [1], [0], [0], [0, 0, 1, 0], [], []>} : vector<8x8xbf16>, vector<128x8xbf16>, vector<8x128xf32> -> vector<8x128xf32>
    %cst_53 = arith.constant -1.000000e+30 : f32
    %79 = vector.broadcast %cst_53 : f32 to vector<8x128xf32>
    %80 = arith.select %2, %78, %79 : vector<8x128xi1>, vector<8x128xf32>
    %cst_54 = arith.constant dense<0xFF800000> : vector<8xf32>
    %81 = vector.multi_reduction <maximumf>, %80, %cst_54 [1] : vector<8x128xf32> to vector<8xf32>
    %82 = vector.shape_cast %81 : vector<8xf32> to vector<8x1xf32>
    %83 = vector.broadcast %82 : vector<8x1xf32> to vector<8x128xf32>
    %84 = arith.subf %80, %83 : vector<8x128xf32>
    %85 = math.exp %84 : vector<8x128xf32>
    %cst_55 = arith.constant dense<0.000000e+00> : vector<8xf32>
    %86 = vector.multi_reduction <add>, %85, %cst_55 [1] : vector<8x128xf32> to vector<8xf32>
    %87 = vector.shape_cast %86 : vector<8xf32> to vector<8x1xf32>
    %88 = arith.truncf %85 : vector<8x128xf32> to vector<8x128xbf16>
    %cst_56 = arith.constant dense<0.000000e+00> : vector<8x8xf32>
    %89 = tpu.matmul %88, %77, %cst_56 {dimension_numbers = #tpu.dot_dimension_numbers<[1], [0], [0], [1], [0, 0, 1, 1], [], []>} : vector<8x128xbf16>, vector<128x8xbf16>, vector<8x8xf32> -> vector<8x8xf32>
    %90 = tpu.reciprocal %87 {approx = true} : vector<8x1xf32> -> vector<8x1xf32>
    %91 = vector.broadcast %90 : vector<8x1xf32> to vector<8x8xf32>
    %92 = arith.mulf %89, %91 : vector<8x8xf32>
    %93 = arith.truncf %92 : vector<8x8xf32> to vector<8x8xbf16>
    %c0_57 = arith.constant 0 : index
    %c24_58 = arith.constant 24 : index
    %94 = vector.load %arg8[%c0_57, %c24_58] : memref<8x32xbf16, #tpu.memory_space<vmem>>, vector<8x8xbf16>
    tpu.vector_store %arg8[%c0_57, %c24_58], %93 {strides = array<i32>} : memref<8x32xbf16, #tpu.memory_space<vmem>>, vector<8x8xbf16>,
    %c0_59 = arith.constant 0 : index
    %c0_60 = arith.constant 0 : index
    %95 = vector.load %arg8[%c0_59, %c0_60] : memref<8x32xbf16, #tpu.memory_space<vmem>>, vector<8x32xbf16>
    %c0_61 = arith.constant 0 : index
    %c0_62 = arith.constant 0 : index
    %96 = vector.load %arg5[%c0_61, %c0_62] : memref<32x32xbf16, #tpu.memory_space<vmem>>, vector<32x32xbf16>
    %cst_63 = arith.constant dense<0.000000e+00> : vector<8x32xf32>
    %97 = tpu.matmul %95, %96, %cst_63 {dimension_numbers = #tpu.dot_dimension_numbers<[1], [0], [0], [1], [0, 0, 1, 1], [], []>} : vector<8x32xbf16>, vector<32x32xbf16>, vector<8x32xf32> -> vector<8x32xf32>
    %c0_64 = arith.constant 0 : index
    %c0_65 = arith.constant 0 : index
    %98 = vector.load %arg6[%c0_64, %c0_65] : memref<1x32xf32, #tpu.memory_space<vmem>>, vector<1x32xf32>
    %99 = vector.shape_cast %98 : vector<1x32xf32> to vector<32xf32>
    %100 = vector.shape_cast %99 : vector<32xf32> to vector<1x32xf32>
    %101 = vector.broadcast %100 : vector<1x32xf32> to vector<8x32xf32>
    %102 = arith.addf %97, %101 : vector<8x32xf32>
    %c0_66 = arith.constant 0 : index
    %c0_67 = arith.constant 0 : index
    %c0_68 = arith.constant 0 : index
    %103 = vector.load %arg7[%c0_66, %c0_67, %c0_68] : memref<1x8x32xf32, #tpu.memory_space<vmem>>, vector<1x8x32xf32>
    %104 = vector.shape_cast %103 : vector<1x8x32xf32> to vector<8x32xf32>
    %105 = vector.shape_cast %102 : vector<8x32xf32> to vector<1x8x32xf32>
    tpu.vector_store %arg7[%c0_66, %c0_67, %c0_68], %105 {strides = array<i32>} : memref<1x8x32xf32, #tpu.memory_space<vmem>>, vector<1x8x32xf32>,
    return
  }
  func.func @transform_0(%arg0: i32, %arg1: i32) -> (i32, i32, i32) {
    %c0_i32 = arith.constant 0 : i32
    %c0_i32_0 = arith.constant 0 : i32
    return %arg0, %arg1, %c0_i32 : i32, i32, i32
  }
  func.func @transform_1(%arg0: i32, %arg1: i32) -> (i32, i32, i32) {
    %c0_i32 = arith.constant 0 : i32
    %c0_i32_0 = arith.constant 0 : i32
    %c0_i32_1 = arith.constant 0 : i32
    return %arg0, %c0_i32, %c0_i32_0 : i32, i32, i32
  }
  func.func @transform_2(%arg0: i32, %arg1: i32) -> (i32, i32, i32) {
    %c0_i32 = arith.constant 0 : i32
    %c0_i32_0 = arith.constant 0 : i32
    %c0_i32_1 = arith.constant 0 : i32
    return %arg0, %c0_i32, %c0_i32_0 : i32, i32, i32
  }
  func.func @transform_3(%arg0: i32, %arg1: i32) -> (i32, i32) {
    %c0_i32 = arith.constant 0 : i32
    %c0_i32_0 = arith.constant 0 : i32
    %c0_i32_1 = arith.constant 0 : i32
    return %c0_i32, %c0_i32_0 : i32, i32
  }
  func.func @transform_4(%arg0: i32, %arg1: i32) -> (i32, i32) {
    %c0_i32 = arith.constant 0 : i32
    %c0_i32_0 = arith.constant 0 : i32
    %c0_i32_1 = arith.constant 0 : i32
    return %c0_i32, %c0_i32_0 : i32, i32
  }
  func.func @transform_5(%arg0: i32, %arg1: i32) -> (i32, i32, i32) {
    %c0_i32 = arith.constant 0 : i32
    %c0_i32_0 = arith.constant 0 : i32
    return %arg0, %arg1, %c0_i32 : i32, i32, i32
  }
}

</mosaic_0001>

<llo_original>
// kernel: tpu_custom_call.1
$region0: #{tpu_custom_call.1}
  #allocation0 [shape = 'u32[]', space=smem, size = 0x4, offset = 0x4, fixed_abs, tag = 'smem constant byte address 0x4 - core index']
  #allocation1 [shape = 'u32[144,128]{1,0:T(1,128)}', space=vmem, size = 0x12000, scoped, tag = 'internal scratch']
  #allocation2 [shape = 'bf16[8,32]{1,0:T(8,128)(2,1)}', space=vmem, size = 0x800, scoped, tag = 'scratch operand']
  %s0 = inlined_call_operand.vmem [shape: bf16[2,8,32], index: 0, kind: input, shape index: {}]
  %s1 = inlined_call_operand.vmem [shape: bf16[2,128,32], index: 1, kind: input, shape index: {}]
  %s2 = inlined_call_operand.vmem [shape: bf16[2,128,32], index: 2, kind: input, shape index: {}]
  %s3 = inlined_call_operand.vmem [shape: bf16[32,32], index: 3, kind: input, shape index: {}]
  %s4 = inlined_call_operand.vmem [shape: f32[1,32], index: 4, kind: input, shape index: {}]
  %s5 = inlined_call_operand.hbm [shape: f32[2,8,32], index: 5, kind: output, shape index: {}]
  %s6 = sld [smem:[#allocation0]]
  $region53: #{tpu_custom_call.1} parent=0
    _
  %s8 = ssub.s32 1, %s6
  %s9 = scalar_select 0, %s8, %s6
  $region1: #{tpu_custom_call.1} parent=0
    #allocation3 [shape = 'u8[8192]{0}', space=vmem, size = 0x2000, scoped, tag = 'output window, operand 0']
    #allocation4 [shape = 's32[2]{0}', space=sflag, size = 0x8, scoped, tag = 'scoped memory for tpu_custom_call.1']
    %10 = vsyncpa [#allocation4], 0
    %s11 = scalar_lea.sflag [#allocation4], 1
    %12 = vsyncpa %s11, 0
    loop: start=0, step=1, limit=4
    $region2: #{tpu_custom_call.1} parent=1 // loop_pre_header
      _
    $region3: #{tpu_custom_call.1} parent=1 // loop_header
      %s14 = sphi 0, %s18
      %p15 = scmp.ge.s32.totalorder %s14, 4
      %s21 = sphi 0, %s33
      %s22 = sphi 0, %s29
      %s23 = sphi 0, %s21
      %s24 = sphi 0, %s22
      %s25 = sphi 0, %s23
      %s26 = sphi 0, %s24
      %s38 = sphi 0, %s40
      %s41 = sphi 0, %s38
      %s42 = sphi 0, %s41
      %s58 = sphi 0, %s42
      %s64 = sphi 0, %s66
      %s67 = sphi 0, %s64
      %s68 = sphi 0, %s67
      %s84 = sphi 0, %s68
      %s90 = sphi 0, %s92
      %s93 = sphi 0, %s90
      %s94 = sphi 0, %s93
      %s110 = sphi 0, %s94
      %s114 = sphi 0, %s114
      %s116 = sphi 0, %s114
      %s117 = sphi 0, %s116
      %s131 = sphi 0, %s117
      %s135 = sphi 0, %s135
      %s137 = sphi 0, %s135
      %s138 = sphi 0, %s137
      %s152 = sphi 0, %s138
      %s160 = sphi 0, %s162
      %s163 = sphi 0, %s160
      %s164 = sphi 0, %s163
      %s180 = sphi 0, %s164
    $region4: #{tpu_custom_call.1} parent=1 // loop_header_branch
      %17 = sbr.rel (%p15) target = $region8
    $region5: #{tpu_custom_call.1} parent=1 // loop_body
      %s19 = ssub.s32 %s14, 1
      %s20 = ssub.s32 %s14, 2
      %s27 = sadd.s32 1, %s22
      %p28 = scmp.ge.s32.totalorder %s27, 1
      %s29 = scalar_select %p28, 0, %s27
      %s30 = sadd.s32 1, %s21
      %s31 = scalar_select %p28, %s30, %s21
      %p32 = scmp.ge.s32.totalorder %s31, 2
      %s33 = scalar_select %p32, 0, %s31
      %s34 = ssub.s32 %s21, %s33
      %s35 = ssub.s32 %s22, %s29
      %s36 = sor.u32 %s34, %s35
      %p37 = scmp.eq.s32.totalorder %s36, 0
      %s39 = sadd.s32 %s38, 1
      %s40 = scalar_select %p37, %s38, %s39
      %p43 = pneg %p37
      %p44 = scmp.eq.s32.totalorder %s14, 1
      %p45 = por %p43, %p44
      %p46 = scmp.ne.s32.totalorder %s38, %s41
      %p47 = scmp.eq.s32.totalorder %s14, 0
      %p48 = por %p46, %p47
      %p49 = scmp.ne.s32.totalorder %s38, %s41
      %p50 = scmp.eq.s32.totalorder %s19, 1
      %p51 = por %p49, %p50
      %p52 = scmp.ne.s32.totalorder %s41, %s42
      %p53 = scmp.eq.s32.totalorder %s19, 0
      %p54 = por %p52, %p53
      %p55 = scmp.ne.s32.totalorder %s41, %s42
      %p56 = scmp.eq.s32.totalorder %s20, 1
      %p57 = por %p55, %p56
      %p59 = scmp.ne.s32.totalorder %s42, %s58
      %p60 = scmp.eq.s32.totalorder %s20, 0
      %p61 = por %p59, %p60
      %s62 = ssub.s32 %s21, %s33
      %p63 = scmp.eq.s32.totalorder %s62, 0
      %s65 = sadd.s32 %s64, 1
      %s66 = scalar_select %p63, %s64, %s65
      %p69 = pneg %p63
      %p70 = scmp.eq.s32.totalorder %s14, 1
      %p71 = por %p69, %p70
      %p72 = scmp.ne.s32.totalorder %s64, %s67
      %p73 = scmp.eq.s32.totalorder %s14, 0
      %p74 = por %p72, %p73
      %p75 = scmp.ne.s32.totalorder %s64, %s67
      %p76 = scmp.eq.s32.totalorder %s19, 1
      %p77 = por %p75, %p76
      %p78 = scmp.ne.s32.totalorder %s67, %s68
      %p79 = scmp.eq.s32.totalorder %s19, 0
      %p80 = por %p78, %p79
      %p81 = scmp.ne.s32.totalorder %s67, %s68
      %p82 = scmp.eq.s32.totalorder %s20, 1
      %p83 = por %p81, %p82
      %p85 = scmp.ne.s32.totalorder %s68, %s84
      %p86 = scmp.eq.s32.totalorder %s20, 0
      %p87 = por %p85, %p86
      %s88 = ssub.s32 %s21, %s33
      %p89 = scmp.eq.s32.totalorder %s88, 0
      %s91 = sadd.s32 %s90, 1
      %s92 = scalar_select %p89, %s90, %s91
      %p95 = pneg %p89
      %p96 = scmp.eq.s32.totalorder %s14, 1
      %p97 = por %p95, %p96
      %p98 = scmp.ne.s32.totalorder %s90, %s93
      %p99 = scmp.eq.s32.totalorder %s14, 0
      %p100 = por %p98, %p99
      %p101 = scmp.ne.s32.totalorder %s90, %s93
      %p102 = scmp.eq.s32.totalorder %s19, 1
      %p103 = por %p101, %p102
      %p104 = scmp.ne.s32.totalorder %s93, %s94
      %p105 = scmp.eq.s32.totalorder %s19, 0
      %p106 = por %p104, %p105
      %p107 = scmp.ne.s32.totalorder %s93, %s94
      %p108 = scmp.eq.s32.totalorder %s20, 1
      %p109 = por %p107, %p108
      %p111 = scmp.ne.s32.totalorder %s94, %s110
      %p112 = scmp.eq.s32.totalorder %s20, 0
      %p113 = por %p111, %p112
      %s115 = sadd.s32 %s114, 1
      %p118 = scmp.eq.s32.totalorder %s14, 1
      %p119 = scmp.ne.s32.totalorder %s114, %s116
      %p120 = scmp.eq.s32.totalorder %s14, 0
      %p121 = por %p119, %p120
      %p122 = scmp.ne.s32.totalorder %s114, %s116
      %p123 = scmp.eq.s32.totalorder %s19, 1
      %p124 = por %p122, %p123
      %p125 = scmp.ne.s32.totalorder %s116, %s117
      %p126 = scmp.eq.s32.totalorder %s19, 0
      %p127 = por %p125, %p126
      %p128 = scmp.ne.s32.totalorder %s116, %s117
      %p129 = scmp.eq.s32.totalorder %s20, 1
      %p130 = por %p128, %p129
      %p132 = scmp.ne.s32.totalorder %s117, %s131
      %p133 = scmp.eq.s32.totalorder %s20, 0
      %p134 = por %p132, %p133
      %s136 = sadd.s32 %s135, 1
      %p139 = scmp.eq.s32.totalorder %s14, 1
      %p140 = scmp.ne.s32.totalorder %s135, %s137
      %p141 = scmp.eq.s32.totalorder %s14, 0
      %p142 = por %p140, %p141
      %p143 = scmp.ne.s32.totalorder %s135, %s137
      %p144 = scmp.eq.s32.totalorder %s19, 1
      %p145 = por %p143, %p144
      %p146 = scmp.ne.s32.totalorder %s137, %s138
      %p147 = scmp.eq.s32.totalorder %s19, 0
      %p148 = por %p146, %p147
      %p149 = scmp.ne.s32.totalorder %s137, %s138
      %p150 = scmp.eq.s32.totalorder %s20, 1
      %p151 = por %p149, %p150
      %p153 = scmp.ne.s32.totalorder %s138, %s152
      %p154 = scmp.eq.s32.totalorder %s20, 0
      %p155 = por %p153, %p154
      %s156 = ssub.s32 %s21, %s33
      %s157 = ssub.s32 %s22, %s29
      %s158 = sor.u32 %s156, %s157
      %p159 = scmp.eq.s32.totalorder %s158, 0
      %s161 = sadd.s32 %s160, 1
      %s162 = scalar_select %p159, %s160, %s161
      %p165 = pneg %p159
      %p166 = scmp.eq.s32.totalorder %s14, 1
      %p167 = por %p165, %p166
      %p168 = scmp.ne.s32.totalorder %s160, %s163
      %p169 = scmp.eq.s32.totalorder %s14, 0
      %p170 = por %p168, %p169
      %p171 = scmp.ne.s32.totalorder %s160, %s163
      %p172 = scmp.eq.s32.totalorder %s19, 1
      %p173 = por %p171, %p172
      %p174 = scmp.ne.s32.totalorder %s163, %s164
      %p175 = scmp.eq.s32.totalorder %s19, 0
      %p176 = por %p174, %p175
      %p177 = scmp.ne.s32.totalorder %s163, %s164
      %p178 = scmp.eq.s32.totalorder %s20, 1
      %p179 = por %p177, %p178
      %p181 = scmp.ne.s32.totalorder %s164, %s180
      %p182 = scmp.eq.s32.totalorder %s20, 0
      %p183 = por %p181, %p182
      %p184 = scmp.le.s32.totalorder 1, %s14
      %p185 = scmp.lt.s32.totalorder %s14, 3
      %p186 = pnand %p184, %p185
      %p187 = pneg %p186
      // Predicated region
      $region9: #{tpu_custom_call.1} parent=5 // pred_check
        _
      $region10: #{tpu_custom_call.1} parent=5 // pred_check_branch
        %189 = sbr.rel (%p186) target = $region12
      $region11: #{tpu_custom_call.1} parent=5 // pred_region
        %s190 = ssub.s32 %s14, 1
        // Predicated region
        $region13: #{tpu_custom_call.1} parent=11 // pred_check
          %p191 = pneg %p127
        $region14: #{tpu_custom_call.1} parent=11 // pred_check_branch
          %193 = sbr.rel (%p191) target = $region16
        $region15: #{tpu_custom_call.1} parent=11 // pred_region
          _
        $region16: #{tpu_custom_call.1} parent=11 // pred_fallthru
          _
        // Predicated region
        $region17: #{tpu_custom_call.1} parent=11 // pred_check
          %p194 = pneg %p148
        $region18: #{tpu_custom_call.1} parent=11 // pred_check_branch
          %196 = sbr.rel (%p194) target = $region20
        $region19: #{tpu_custom_call.1} parent=11 // pred_region
          _
        $region20: #{tpu_custom_call.1} parent=11 // pred_fallthru
          _
      $region12: #{tpu_custom_call.1} parent=5 // pred_fallthru
        _
      %p197 = scmp.lt.s32.totalorder %s14, 2
      // Predicated region
      $region21: #{tpu_custom_call.1} parent=5 // pred_check
        %p198 = pneg %p197
      $region22: #{tpu_custom_call.1} parent=5 // pred_check_branch
        %200 = sbr.rel (%p198) target = $region24
      $region23: #{tpu_custom_call.1} parent=5 // pred_region
        // Predicated region
        $region25: #{tpu_custom_call.1} parent=23 // pred_check
          %p201 = pneg %p48
        $region26: #{tpu_custom_call.1} parent=23 // pred_check_branch
          %203 = sbr.rel (%p201) target = $region28
        $region27: #{tpu_custom_call.1} parent=23 // pred_region
          %p204 = scmp.lt.s32.totalorder %s21, 1
          %s205 = scalar_select %p204, %s21, 1
          %p206 = scmp.lt.s32.totalorder %s22, 0
          %s207 = scalar_select %p206, %s22, 0
          %s208 = sadd.s32 %s207, %s205
          %s209 = smul.addr %s208, 4
          %s210 = scalar_lea.vmem %s0, %s209
        $region28: #{tpu_custom_call.1} parent=23 // pred_fallthru
          _
        // Predicated region
        $region29: #{tpu_custom_call.1} parent=23 // pred_check
          %p211 = pneg %p74
        $region30: #{tpu_custom_call.1} parent=23 // pred_check_branch
          %213 = sbr.rel (%p211) target = $region32
        $region31: #{tpu_custom_call.1} parent=23 // pred_region
          %p214 = scmp.lt.s32.totalorder %s21, 1
          %s215 = scalar_select %p214, %s21, 1
          %s216 = smul.addr %s215, 16
          %s217 = smul.addr %s216, 4
          %s218 = scalar_lea.vmem %s1, %s217
        $region32: #{tpu_custom_call.1} parent=23 // pred_fallthru
          _
        // Predicated region
        $region33: #{tpu_custom_call.1} parent=23 // pred_check
          %p219 = pneg %p100
        $region34: #{tpu_custom_call.1} parent=23 // pred_check_branch
          %221 = sbr.rel (%p219) target = $region36
        $region35: #{tpu_custom_call.1} parent=23 // pred_region
          %p222 = scmp.lt.s32.totalorder %s21, 1
          %s223 = scalar_select %p222, %s21, 1
          %s224 = smul.addr %s223, 16
          %s225 = smul.addr %s224, 4
          %s226 = scalar_lea.vmem %s2, %s225
        $region36: #{tpu_custom_call.1} parent=23 // pred_fallthru
          _
      $region24: #{tpu_custom_call.1} parent=5 // pred_fallthru
        _
      %p227 = scmp.le.s32.totalorder 1, %s14
      %p228 = scmp.lt.s32.totalorder %s14, 3
      %p229 = pnand %p227, %p228
      %p230 = pneg %p229
      // Predicated region
      $region37: #{tpu_custom_call.1} parent=5 // pred_check
        _
      $region38: #{tpu_custom_call.1} parent=5 // pred_check_branch
        %232 = sbr.rel (%p229) target = $region40
      $region39: #{tpu_custom_call.1} parent=5 // pred_region
        %s233 = ssub.s32 %s14, 1
        %p234 = scmp.lt.s32.totalorder %s23, 1
        %s235 = scalar_select %p234, %s23, 1
        %p236 = scmp.lt.s32.totalorder %s24, 0
        %s237 = scalar_select %p236, %s24, 0
        %s238 = sadd.s32 %s237, %s235
        %s239 = smul.addr %s238, 4
        %s240 = scalar_lea.vmem %s0, %s239
        %p241 = pneg %p54
        %p242 = pneg %p51
        %p243 = scmp.lt.s32.totalorder %s23, 1
        %s244 = scalar_select %p243, %s23, 1
        %s245 = smul.addr %s244, 16
        %s246 = smul.addr %s245, 4
        %s247 = scalar_lea.vmem %s1, %s246
        %p248 = pneg %p80
        %p249 = pneg %p77
        %p250 = scmp.lt.s32.totalorder %s23, 1
        %s251 = scalar_select %p250, %s23, 1
        %s252 = smul.addr %s251, 16
        %s253 = smul.addr %s252, 4
        %s254 = scalar_lea.vmem %s2, %s253
        %p255 = pneg %p106
        %p256 = pneg %p103
        %p257 = pneg %p127
        %p258 = pneg %p124
        %p259 = pneg %p148
        %p260 = pneg %p145
        %p261 = pneg %p176
        %p262 = pneg %p173
        %s263 = sand.u32 %s163, 1
        %s264 = scalar_lea.sflag [#allocation4], %s263
        %s265 = sand.u32 %s163, 1
        %s266 = smul.addr %s265, 8
        %s267 = scalar_lea.vmem [#allocation3], %s266
        %p268 = scmp.lt.s32.totalorder %s23, 1
        %s269 = scalar_select %p268, %s23, 1
        %p270 = scmp.lt.s32.totalorder %s24, 0
        %s271 = scalar_select %p270, %s24, 0
        %s272 = sadd.s32 %s271, %s269
        %s273 = smul.addr %s272, 4
        %s274 = scalar_lea.vmem %s0, %s273
        %p275 = scmp.lt.s32.totalorder %s23, 1
        %s276 = scalar_select %p275, %s23, 1
        %s277 = smul.addr %s276, 16
        %s278 = smul.addr %s277, 4
        %s279 = scalar_lea.vmem %s1, %s278
        %p280 = scmp.lt.s32.totalorder %s23, 1
        %s281 = scalar_select %p280, %s23, 1
        %s282 = smul.addr %s281, 16
        %s283 = smul.addr %s282, 4
        %s284 = scalar_lea.vmem %s2, %s283
        %v286 = vlaneseq
        %v287 = vand.u32 %v286, 127
        %vm288 = vcmp.lt.s32.totalorder %v287, 8
        %v289 = vld [vmem:[%s274] sm:$0xf]
        %v290 = vld [vmem:[%s279] sm:$0xf]
        %v291 = vld [vmem:[%s279 + $0x4] sm:$0xf]
        %v292 = vld [vmem:[%s279 + $0x8] sm:$0xf]
        %v293 = vld [vmem:[%s279 + $0xc] sm:$0xf]
        %v294 = vld [vmem:[%s279 + $0x10] sm:$0xf]
        %v295 = vld [vmem:[%s279 + $0x14] sm:$0xf]
        %v296 = vld [vmem:[%s279 + $0x18] sm:$0xf]
        %v297 = vld [vmem:[%s279 + $0x1c] sm:$0xf]
        %v298 = vld [vmem:[%s279 + $0x20] sm:$0xf]
        %v299 = vld [vmem:[%s279 + $0x24] sm:$0xf]
        %v300 = vld [vmem:[%s279 + $0x28] sm:$0xf]
        %v301 = vld [vmem:[%s279 + $0x2c] sm:$0xf]
        %v302 = vld [vmem:[%s279 + $0x30] sm:$0xf]
        %v303 = vld [vmem:[%s279 + $0x34] sm:$0xf]
        %v304 = vld [vmem:[%s279 + $0x38] sm:$0xf]
        %v305 = vld [vmem:[%s279 + $0x3c] sm:$0xf]
        %v306 = vld [vmem:[%s284] sm:$0xf]
        %v307 = vld [vmem:[%s284 + $0x4] sm:$0xf]
        %v308 = vld [vmem:[%s284 + $0x8] sm:$0xf]
        %v309 = vld [vmem:[%s284 + $0xc] sm:$0xf]
        %v310 = vld [vmem:[%s284 + $0x10] sm:$0xf]
        %v311 = vld [vmem:[%s284 + $0x14] sm:$0xf]
        %v312 = vld [vmem:[%s284 + $0x18] sm:$0xf]
        %v313 = vld [vmem:[%s284 + $0x1c] sm:$0xf]
        %v314 = vld [vmem:[%s284 + $0x20] sm:$0xf]
        %v315 = vld [vmem:[%s284 + $0x24] sm:$0xf]
        %v316 = vld [vmem:[%s284 + $0x28] sm:$0xf]
        %v317 = vld [vmem:[%s284 + $0x2c] sm:$0xf]
        %v318 = vld [vmem:[%s284 + $0x30] sm:$0xf]
        %v319 = vld [vmem:[%s284 + $0x34] sm:$0xf]
        %v320 = vld [vmem:[%s284 + $0x38] sm:$0xf]
        %v321 = vld [vmem:[%s284 + $0x3c] sm:$0xf]
        %v338 = vunpack.c.l.b16 %v290
        %v339 = vunpack.c.l.b16 %v291
        %v340 = vunpack.c.l.b16 %v292
        %v341 = vunpack.c.l.b16 %v293
        %v342 = vunpack.c.l.b16 %v294
        %v343 = vunpack.c.l.b16 %v295
        %v344 = vunpack.c.l.b16 %v296
        %v345 = vunpack.c.l.b16 %v297
        %v346 = vunpack.c.l.b16 %v298
        %v347 = vunpack.c.l.b16 %v299
        %v348 = vunpack.c.l.b16 %v300
        %v349 = vunpack.c.l.b16 %v301
        %v350 = vunpack.c.l.b16 %v302
        %v351 = vunpack.c.l.b16 %v303
        %v352 = vunpack.c.l.b16 %v304
        %v353 = vunpack.c.l.b16 %v305
        %v354 = vpack.c.b16 %v339, %v338
        %v355 = vpack.c.b16 %v341, %v340
        %v356 = vpack.c.b16 %v343, %v342
        %v357 = vpack.c.b16 %v345, %v344
        %v358 = vpack.c.b16 %v347, %v346
        %v359 = vpack.c.b16 %v349, %v348
        %v360 = vpack.c.b16 %v351, %v350
        %v361 = vpack.c.b16 %v353, %v352
        %vm362 = vcmask 64512
        %v364 = vsel %vm362, %v289, 0
        %v367 = vsel %vm362, %v354, 0
        %v370 = vsel %vm362, %v355, 0
        %v373 = vsel %vm362, %v356, 0
        %v376 = vsel %vm362, %v357, 0
        %v379 = vsel %vm362, %v358, 0
        %v382 = vsel %vm362, %v359, 0
        %v385 = vsel %vm362, %v360, 0
        %v388 = vsel %vm362, %v361, 0
        %390 = vmatprep.subr.bf16.mxu0 0
        %391 = vmatpush1.bf16.xpose.msra.mxu0 %v388
        %392 = vmatprep.subr.bf16.mxu0 0
        %393 = vmatpush1.bf16.xpose.msra.mxu0 %v385
        %394 = vmatprep.subr.bf16.mxu0 0
        %395 = vmatpush1.bf16.xpose.msra.mxu0 %v382
        %396 = vmatprep.subr.bf16.mxu0 0
        %397 = vmatpush1.bf16.xpose.msra.mxu0 %v379
        %398 = vmatprep.subr.bf16.mxu0 0
        %399 = vmatpush1.bf16.xpose.msra.mxu0 %v376
        %400 = vmatprep.subr.bf16.mxu0 0
        %401 = vmatpush1.bf16.xpose.msra.mxu0 %v373
        %402 = vmatprep.subr.bf16.mxu0 0
        %403 = vmatpush1.bf16.xpose.msra.mxu0 %v370
        %404 = vmatprep.subr.bf16.mxu0 0
        %405 = vmatpush1.bf16.xpose.msra.mxu0 %v367
        %406 = vmatprep.subr.bf16.mxu0 0
        %407 = vmatpush2.bf16.xpose.msra.mxu0 0
        %408 = vmatprep.subr.bf16.mxu0 0
        %409 = vmatpush2.bf16.xpose.msra.mxu0 0
        %410 = vmatprep.subr.bf16.mxu0 0
        %411 = vmatpush2.bf16.xpose.msra.mxu0 0
        %412 = vmatprep.subr.bf16.mxu0 0
        %413 = vmatpush2.bf16.xpose.msra.mxu0 0
        %414 = vmatprep.subr.bf16.mxu0 0
        %415 = vmatpush2.bf16.xpose.msra.mxu0 0
        %416 = vmatprep.subr.bf16.mxu0 0
        %417 = vmatpush2.bf16.xpose.msra.mxu0 0
        %418 = vmatprep.subr.bf16.mxu0 0
        %419 = vmatpush2.bf16.xpose.msra.mxu0 0
        %420 = vmatprep.subr.bf16.mxu0 0
        %421 = vmatpush2.bf16.xpose.msra.mxu0 0
        %422 = vmatprep.mubr.bf16.mxu0 0
        %423 = vmatmul.mubr.bf16.gmra.mxu0 %v364
        %v424 = vpop.f32.mrf.mxu0
        %v425 = vadd.f32 0.0, %v424
        %v426 = vpop.f32.mrf.mxu0
        %v427 = vpop.f32.mrf.mxu0
        %v428 = vpop.f32.mrf.mxu0
        %429 = vdwg.mxu0
        %v430 = vsel %vm288, %v425, -1e+30
        %431 = vmax.xlane.f32.xlu0 %v430
        %v432 = vpop.xlane.xlu0 %431
        %v433 = vsub.f32 %v430, %v432
        %v434 = vmul.f32 %v433, 1.442695
        %v435 = vpow.pop %v434
        %436 = vadd.xlane.f32.xlu0 %v435
        %v437 = vpop.xlane.xlu0 %436
        %v438 = vpack.c.bf16 %v435, %v435
        %v455 = vunpack.c.l.b16 %v306
        %v456 = vunpack.c.l.b16 %v307
        %v457 = vunpack.c.l.b16 %v308
        %v458 = vunpack.c.l.b16 %v309
        %v459 = vunpack.c.l.b16 %v310
        %v460 = vunpack.c.l.b16 %v311
        %v461 = vunpack.c.l.b16 %v312
        %v462 = vunpack.c.l.b16 %v313
        %v463 = vunpack.c.l.b16 %v314
        %v464 = vunpack.c.l.b16 %v315
        %v465 = vunpack.c.l.b16 %v316
        %v466 = vunpack.c.l.b16 %v317
        %v467 = vunpack.c.l.b16 %v318
        %v468 = vunpack.c.l.b16 %v319
        %v469 = vunpack.c.l.b16 %v320
        %v470 = vunpack.c.l.b16 %v321
        %v471 = vpack.c.b16 %v456, %v455
        %v472 = vpack.c.b16 %v458, %v457
        %v473 = vpack.c.b16 %v460, %v459
        %v474 = vpack.c.b16 %v462, %v461
        %v475 = vpack.c.b16 %v464, %v463
        %v476 = vpack.c.b16 %v466, %v465
        %v477 = vpack.c.b16 %v468, %v467
        %v478 = vpack.c.b16 %v470, %v469
        %487 = vmatprep.subr.bf16.mxu0 0
        %488 = vmatpush1.bf16.msra.mxu0 %v478
        %489 = vmatprep.subr.bf16.mxu0 0
        %490 = vmatpush1.bf16.msra.mxu0 %v477
        %491 = vmatprep.subr.bf16.mxu0 0
        %492 = vmatpush1.bf16.msra.mxu0 %v476
        %493 = vmatprep.subr.bf16.mxu0 0
        %494 = vmatpush1.bf16.msra.mxu0 %v475
        %495 = vmatprep.subr.bf16.mxu0 0
        %496 = vmatpush1.bf16.msra.mxu0 %v474
        %497 = vmatprep.subr.bf16.mxu0 0
        %498 = vmatpush1.bf16.msra.mxu0 %v473
        %499 = vmatprep.subr.bf16.mxu0 0
        %500 = vmatpush1.bf16.msra.mxu0 %v472
        %501 = vmatprep.subr.bf16.mxu0 0
        %502 = vmatpush1.bf16.msra.mxu0 %v471
        %503 = vmatprep.subr.bf16.mxu0 0
        %504 = vmatpush2.bf16.msra.mxu0 0
        %505 = vmatprep.subr.bf16.mxu0 0
        %506 = vmatpush2.bf16.msra.mxu0 0
        %507 = vmatprep.subr.bf16.mxu0 0
        %508 = vmatpush2.bf16.msra.mxu0 0
        %509 = vmatprep.subr.bf16.mxu0 0
        %510 = vmatpush2.bf16.msra.mxu0 0
        %511 = vmatprep.subr.bf16.mxu0 0
        %512 = vmatpush2.bf16.msra.mxu0 0
        %513 = vmatprep.subr.bf16.mxu0 0
        %514 = vmatpush2.bf16.msra.mxu0 0
        %515 = vmatprep.subr.bf16.mxu0 0
        %516 = vmatpush2.bf16.msra.mxu0 0
        %517 = vmatprep.subr.bf16.mxu0 0
        %518 = vmatpush2.bf16.msra.mxu0 0
        %519 = vmatprep.mubr.bf16.mxu0 0
        %520 = vmatmul.mubr.bf16.gmra.mxu0 %v438
        %v521 = vpop.f32.mrf.mxu0
        %v522 = vadd.f32 0.0, %v521
        %v523 = vpop.f32.mrf.mxu0
        %v524 = vpop.f32.mrf.mxu0
        %v525 = vpop.f32.mrf.mxu0
        %526 = vdwg.mxu0
        %v527 = vrcp.pop %v437
        %v528 = vmul.f32 %v522, %v527
        %v529 = vpack.c.bf16 %v528, %v528
        %vm530 = vcmask 60416
        %531 = vst.msk [vmem:[#allocation2] sm:$0xf] %vm530, %v529
        %v532 = vld [vmem:[%s274] sm:$0xf]
        %v533 = vld [vmem:[%s279] sm:$0xf]
        %v534 = vld [vmem:[%s279 + $0x4] sm:$0xf]
        %v535 = vld [vmem:[%s279 + $0x8] sm:$0xf]
        %v536 = vld [vmem:[%s279 + $0xc] sm:$0xf]
        %v537 = vld [vmem:[%s279 + $0x10] sm:$0xf]
        %v538 = vld [vmem:[%s279 + $0x14] sm:$0xf]
        %v539 = vld [vmem:[%s279 + $0x18] sm:$0xf]
        %v540 = vld [vmem:[%s279 + $0x1c] sm:$0xf]
        %v541 = vld [vmem:[%s279 + $0x20] sm:$0xf]
        %v542 = vld [vmem:[%s279 + $0x24] sm:$0xf]
        %v543 = vld [vmem:[%s279 + $0x28] sm:$0xf]
        %v544 = vld [vmem:[%s279 + $0x2c] sm:$0xf]
        %v545 = vld [vmem:[%s279 + $0x30] sm:$0xf]
        %v546 = vld [vmem:[%s279 + $0x34] sm:$0xf]
        %v547 = vld [vmem:[%s279 + $0x38] sm:$0xf]
        %v548 = vld [vmem:[%s279 + $0x3c] sm:$0xf]
        %v549 = vld [vmem:[%s284] sm:$0xf]
        %v550 = vld [vmem:[%s284 + $0x4] sm:$0xf]
        %v551 = vld [vmem:[%s284 + $0x8] sm:$0xf]
        %v552 = vld [vmem:[%s284 + $0xc] sm:$0xf]
        %v553 = vld [vmem:[%s284 + $0x10] sm:$0xf]
        %v554 = vld [vmem:[%s284 + $0x14] sm:$0xf]
        %v555 = vld [vmem:[%s284 + $0x18] sm:$0xf]
        %v556 = vld [vmem:[%s284 + $0x1c] sm:$0xf]
        %v557 = vld [vmem:[%s284 + $0x20] sm:$0xf]
        %v558 = vld [vmem:[%s284 + $0x24] sm:$0xf]
        %v559 = vld [vmem:[%s284 + $0x28] sm:$0xf]
        %v560 = vld [vmem:[%s284 + $0x2c] sm:$0xf]
        %v561 = vld [vmem:[%s284 + $0x30] sm:$0xf]
        %v562 = vld [vmem:[%s284 + $0x34] sm:$0xf]
        %v563 = vld [vmem:[%s284 + $0x38] sm:$0xf]
        %v564 = vld [vmem:[%s284 + $0x3c] sm:$0xf]
        %v566 = vunpack.c.l.b16 %v532
        %v567 = vpack.c.b16 %v566, %v566
        %568 = vrot.lane.b32.xlu0 %v567, 120
        %v569 = vpop.permute.xlu0 %568
        %v586 = vunpack.c.l.b16 %v533
        %v587 = vunpack.c.l.b16 %v534
        %v588 = vunpack.c.l.b16 %v535
        %v589 = vunpack.c.l.b16 %v536
        %v590 = vunpack.c.l.b16 %v537
        %v591 = vunpack.c.l.b16 %v538
        %v592 = vunpack.c.l.b16 %v539
        %v593 = vunpack.c.l.b16 %v540
        %v594 = vunpack.c.l.b16 %v541
        %v595 = vunpack.c.l.b16 %v542
        %v596 = vunpack.c.l.b16 %v543
        %v597 = vunpack.c.l.b16 %v544
        %v598 = vunpack.c.l.b16 %v545
        %v599 = vunpack.c.l.b16 %v546
        %v600 = vunpack.c.l.b16 %v547
        %v601 = vunpack.c.l.b16 %v548
        %v602 = vpack.c.b16 %v587, %v586
        %v603 = vpack.c.b16 %v589, %v588
        %v604 = vpack.c.b16 %v591, %v590
        %v605 = vpack.c.b16 %v593, %v592
        %v606 = vpack.c.b16 %v595, %v594
        %v607 = vpack.c.b16 %v597, %v596
        %v608 = vpack.c.b16 %v599, %v598
        %v609 = vpack.c.b16 %v601, %v600
        %610 = vrot.lane.b32.xlu0 %v602, 120
        %v611 = vpop.permute.xlu0 %610
        %612 = vrot.lane.b32.xlu0 %v603, 120
        %v613 = vpop.permute.xlu0 %612
        %614 = vrot.lane.b32.xlu0 %v604, 120
        %v615 = vpop.permute.xlu0 %614
        %616 = vrot.lane.b32.xlu0 %v605, 120
        %v617 = vpop.permute.xlu0 %616
        %618 = vrot.lane.b32.xlu0 %v606, 120
        %v619 = vpop.permute.xlu0 %618
        %620 = vrot.lane.b32.xlu0 %v607, 120
        %v621 = vpop.permute.xlu0 %620
        %622 = vrot.lane.b32.xlu0 %v608, 120
        %v623 = vpop.permute.xlu0 %622
        %624 = vrot.lane.b32.xlu0 %v609, 120
        %v625 = vpop.permute.xlu0 %624
        %v627 = vsel %vm362, %v569, 0
        %v630 = vsel %vm362, %v611, 0
        %v633 = vsel %vm362, %v613, 0
        %v636 = vsel %vm362, %v615, 0
        %v639 = vsel %vm362, %v617, 0
        %v642 = vsel %vm362, %v619, 0
        %v645 = vsel %vm362, %v621, 0
        %v648 = vsel %vm362, %v623, 0
        %v651 = vsel %vm362, %v625, 0
        %653 = vmatprep.subr.bf16.mxu0 0
        %654 = vmatpush1.bf16.xpose.msra.mxu0 %v651
        %655 = vmatprep.subr.bf16.mxu0 0
        %656 = vmatpush1.bf16.xpose.msra.mxu0 %v648
        %657 = vmatprep.subr.bf16.mxu0 0
        %658 = vmatpush1.bf16.xpose.msra.mxu0 %v645
        %659 = vmatprep.subr.bf16.mxu0 0
        %660 = vmatpush1.bf16.xpose.msra.mxu0 %v642
        %661 = vmatprep.subr.bf16.mxu0 0
        %662 = vmatpush1.bf16.xpose.msra.mxu0 %v639
        %663 = vmatprep.subr.bf16.mxu0 0
        %664 = vmatpush1.bf16.xpose.msra.mxu0 %v636
        %665 = vmatprep.subr.bf16.mxu0 0
        %666 = vmatpush1.bf16.xpose.msra.mxu0 %v633
        %667 = vmatprep.subr.bf16.mxu0 0
        %668 = vmatpush1.bf16.xpose.msra.mxu0 %v630
        %669 = vmatprep.subr.bf16.mxu0 0
        %670 = vmatpush2.bf16.xpose.msra.mxu0 0
        %671 = vmatprep.subr.bf16.mxu0 0
        %672 = vmatpush2.bf16.xpose.msra.mxu0 0
        %673 = vmatprep.subr.bf16.mxu0 0
        %674 = vmatpush2.bf16.xpose.msra.mxu0 0
        %675 = vmatprep.subr.bf16.mxu0 0
        %676 = vmatpush2.bf16.xpose.msra.mxu0 0
        %677 = vmatprep.subr.bf16.mxu0 0
        %678 = vmatpush2.bf16.xpose.msra.mxu0 0
        %679 = vmatprep.subr.bf16.mxu0 0
        %680 = vmatpush2.bf16.xpose.msra.mxu0 0
        %681 = vmatprep.subr.bf16.mxu0 0
        %682 = vmatpush2.bf16.xpose.msra.mxu0 0
        %683 = vmatprep.subr.bf16.mxu0 0
        %684 = vmatpush2.bf16.xpose.msra.mxu0 0
        %685 = vmatprep.mubr.bf16.mxu0 0
        %686 = vmatmul.mubr.bf16.gmra.mxu0 %v627
        %v687 = vpop.f32.mrf.mxu0
        %v688 = vadd.f32 0.0, %v687
        %v689 = vpop.f32.mrf.mxu0
        %v690 = vpop.f32.mrf.mxu0
        %v691 = vpop.f32.mrf.mxu0
        %692 = vdwg.mxu0
        %v693 = vsel %vm288, %v688, -1e+30
        %694 = vmax.xlane.f32.xlu0 %v693
        %v695 = vpop.xlane.xlu0 %694
        %v696 = vsub.f32 %v693, %v695
        %v697 = vmul.f32 %v696, 1.442695
        %v698 = vpow.pop %v697
        %699 = vadd.xlane.f32.xlu0 %v698
        %v700 = vpop.xlane.xlu0 %699
        %v701 = vpack.c.bf16 %v698, %v698
        %v718 = vunpack.c.l.b16 %v549
        %v719 = vunpack.c.l.b16 %v550
        %v720 = vunpack.c.l.b16 %v551
        %v721 = vunpack.c.l.b16 %v552
        %v722 = vunpack.c.l.b16 %v553
        %v723 = vunpack.c.l.b16 %v554
        %v724 = vunpack.c.l.b16 %v555
        %v725 = vunpack.c.l.b16 %v556
        %v726 = vunpack.c.l.b16 %v557
        %v727 = vunpack.c.l.b16 %v558
        %v728 = vunpack.c.l.b16 %v559
        %v729 = vunpack.c.l.b16 %v560
        %v730 = vunpack.c.l.b16 %v561
        %v731 = vunpack.c.l.b16 %v562
        %v732 = vunpack.c.l.b16 %v563
        %v733 = vunpack.c.l.b16 %v564
        %v734 = vpack.c.b16 %v719, %v718
        %v735 = vpack.c.b16 %v721, %v720
        %v736 = vpack.c.b16 %v723, %v722
        %v737 = vpack.c.b16 %v725, %v724
        %v738 = vpack.c.b16 %v727, %v726
        %v739 = vpack.c.b16 %v729, %v728
        %v740 = vpack.c.b16 %v731, %v730
        %v741 = vpack.c.b16 %v733, %v732
        %742 = vrot.lane.b32.xlu0 %v734, 120
        %v743 = vpop.permute.xlu0 %742
        %744 = vrot.lane.b32.xlu0 %v735, 120
        %v745 = vpop.permute.xlu0 %744
        %746 = vrot.lane.b32.xlu0 %v736, 120
        %v747 = vpop.permute.xlu0 %746
        %748 = vrot.lane.b32.xlu0 %v737, 120
        %v749 = vpop.permute.xlu0 %748
        %750 = vrot.lane.b32.xlu0 %v738, 120
        %v751 = vpop.permute.xlu0 %750
        %752 = vrot.lane.b32.xlu0 %v739, 120
        %v753 = vpop.permute.xlu0 %752
        %754 = vrot.lane.b32.xlu0 %v740, 120
        %v755 = vpop.permute.xlu0 %754
        %756 = vrot.lane.b32.xlu0 %v741, 120
        %v757 = vpop.permute.xlu0 %756
        %766 = vmatprep.subr.bf16.mxu0 0
        %767 = vmatpush1.bf16.msra.mxu0 %v757
        %768 = vmatprep.subr.bf16.mxu0 0
        %769 = vmatpush1.bf16.msra.mxu0 %v755
        %770 = vmatprep.subr.bf16.mxu0 0
        %771 = vmatpush1.bf16.msra.mxu0 %v753
        %772 = vmatprep.subr.bf16.mxu0 0
        %773 = vmatpush1.bf16.msra.mxu0 %v751
        %774 = vmatprep.subr.bf16.mxu0 0
        %775 = vmatpush1.bf16.msra.mxu0 %v749
        %776 = vmatprep.subr.bf16.mxu0 0
        %777 = vmatpush1.bf16.msra.mxu0 %v747
        %778 = vmatprep.subr.bf16.mxu0 0
        %779 = vmatpush1.bf16.msra.mxu0 %v745
        %780 = vmatprep.subr.bf16.mxu0 0
        %781 = vmatpush1.bf16.msra.mxu0 %v743
        %782 = vmatprep.subr.bf16.mxu0 0
        %783 = vmatpush2.bf16.msra.mxu0 0
        %784 = vmatprep.subr.bf16.mxu0 0
        %785 = vmatpush2.bf16.msra.mxu0 0
        %786 = vmatprep.subr.bf16.mxu0 0
        %787 = vmatpush2.bf16.msra.mxu0 0
        %788 = vmatprep.subr.bf16.mxu0 0
        %789 = vmatpush2.bf16.msra.mxu0 0
        %790 = vmatprep.subr.bf16.mxu0 0
        %791 = vmatpush2.bf16.msra.mxu0 0
        %792 = vmatprep.subr.bf16.mxu0 0
        %793 = vmatpush2.bf16.msra.mxu0 0
        %794 = vmatprep.subr.bf16.mxu0 0
        %795 = vmatpush2.bf16.msra.mxu0 0
        %796 = vmatprep.subr.bf16.mxu0 0
        %797 = vmatpush2.bf16.msra.mxu0 0
        %798 = vmatprep.mubr.bf16.mxu0 0
        %799 = vmatmul.mubr.bf16.gmra.mxu0 %v701
        %v800 = vpop.f32.mrf.mxu0
        %v801 = vadd.f32 0.0, %v800
        %v802 = vpop.f32.mrf.mxu0
        %v803 = vpop.f32.mrf.mxu0
        %v804 = vpop.f32.mrf.mxu0
        %805 = vdwg.mxu0
        %v806 = vrcp.pop %v700
        %v807 = vmul.f32 %v801, %v806
        %v808 = vpack.c.bf16 %v807, %v807
        %v810 = vunpack.c.l.b16 %v808
        %v811 = vpack.c.b16 %v810, %v810
        %812 = vrot.lane.b32.xlu0 %v811, 8
        %v813 = vpop.permute.xlu0 %812
        %vm815 = vcmask 126016
        %816 = vst.msk [vmem:[#allocation2] sm:$0xf] %vm815, %v813
        %v817 = vld [vmem:[%s274] sm:$0xf]
        %v818 = vld [vmem:[%s279] sm:$0xf]
        %v819 = vld [vmem:[%s279 + $0x4] sm:$0xf]
        %v820 = vld [vmem:[%s279 + $0x8] sm:$0xf]
        %v821 = vld [vmem:[%s279 + $0xc] sm:$0xf]
        %v822 = vld [vmem:[%s279 + $0x10] sm:$0xf]
        %v823 = vld [vmem:[%s279 + $0x14] sm:$0xf]
        %v824 = vld [vmem:[%s279 + $0x18] sm:$0xf]
        %v825 = vld [vmem:[%s279 + $0x1c] sm:$0xf]
        %v826 = vld [vmem:[%s279 + $0x20] sm:$0xf]
        %v827 = vld [vmem:[%s279 + $0x24] sm:$0xf]
        %v828 = vld [vmem:[%s279 + $0x28] sm:$0xf]
        %v829 = vld [vmem:[%s279 + $0x2c] sm:$0xf]
        %v830 = vld [vmem:[%s279 + $0x30] sm:$0xf]
        %v831 = vld [vmem:[%s279 + $0x34] sm:$0xf]
        %v832 = vld [vmem:[%s279 + $0x38] sm:$0xf]
        %v833 = vld [vmem:[%s279 + $0x3c] sm:$0xf]
        %v834 = vld [vmem:[%s284] sm:$0xf]
        %v835 = vld [vmem:[%s284 + $0x4] sm:$0xf]
        %v836 = vld [vmem:[%s284 + $0x8] sm:$0xf]
        %v837 = vld [vmem:[%s284 + $0xc] sm:$0xf]
        %v838 = vld [vmem:[%s284 + $0x10] sm:$0xf]
        %v839 = vld [vmem:[%s284 + $0x14] sm:$0xf]
        %v840 = vld [vmem:[%s284 + $0x18] sm:$0xf]
        %v841 = vld [vmem:[%s284 + $0x1c] sm:$0xf]
        %v842 = vld [vmem:[%s284 + $0x20] sm:$0xf]
        %v843 = vld [vmem:[%s284 + $0x24] sm:$0xf]
        %v844 = vld [vmem:[%s284 + $0x28] sm:$0xf]
        %v845 = vld [vmem:[%s284 + $0x2c] sm:$0xf]
        %v846 = vld [vmem:[%s284 + $0x30] sm:$0xf]
        %v847 = vld [vmem:[%s284 + $0x34] sm:$0xf]
        %v848 = vld [vmem:[%s284 + $0x38] sm:$0xf]
        %v849 = vld [vmem:[%s284 + $0x3c] sm:$0xf]
        %v851 = vunpack.c.l.b16 %v817
        %v852 = vpack.c.b16 %v851, %v851
        %853 = vrot.lane.b32.xlu0 %v852, 112
        %v854 = vpop.permute.xlu0 %853
        %v871 = vunpack.c.l.b16 %v818
        %v872 = vunpack.c.l.b16 %v819
        %v873 = vunpack.c.l.b16 %v820
        %v874 = vunpack.c.l.b16 %v821
        %v875 = vunpack.c.l.b16 %v822
        %v876 = vunpack.c.l.b16 %v823
        %v877 = vunpack.c.l.b16 %v824
        %v878 = vunpack.c.l.b16 %v825
        %v879 = vunpack.c.l.b16 %v826
        %v880 = vunpack.c.l.b16 %v827
        %v881 = vunpack.c.l.b16 %v828
        %v882 = vunpack.c.l.b16 %v829
        %v883 = vunpack.c.l.b16 %v830
        %v884 = vunpack.c.l.b16 %v831
        %v885 = vunpack.c.l.b16 %v832
        %v886 = vunpack.c.l.b16 %v833
        %v887 = vpack.c.b16 %v872, %v871
        %v888 = vpack.c.b16 %v874, %v873
        %v889 = vpack.c.b16 %v876, %v875
        %v890 = vpack.c.b16 %v878, %v877
        %v891 = vpack.c.b16 %v880, %v879
        %v892 = vpack.c.b16 %v882, %v881
        %v893 = vpack.c.b16 %v884, %v883
        %v894 = vpack.c.b16 %v886, %v885
        %895 = vrot.lane.b32.xlu0 %v887, 112
        %v896 = vpop.permute.xlu0 %895
        %897 = vrot.lane.b32.xlu0 %v888, 112
        %v898 = vpop.permute.xlu0 %897
        %899 = vrot.lane.b32.xlu0 %v889, 112
        %v900 = vpop.permute.xlu0 %899
        %901 = vrot.lane.b32.xlu0 %v890, 112
        %v902 = vpop.permute.xlu0 %901
        %903 = vrot.lane.b32.xlu0 %v891, 112
        %v904 = vpop.permute.xlu0 %903
        %905 = vrot.lane.b32.xlu0 %v892, 112
        %v906 = vpop.permute.xlu0 %905
        %907 = vrot.lane.b32.xlu0 %v893, 112
        %v908 = vpop.permute.xlu0 %907
        %909 = vrot.lane.b32.xlu0 %v894, 112
        %v910 = vpop.permute.xlu0 %909
        %v912 = vsel %vm362, %v854, 0
        %v915 = vsel %vm362, %v896, 0
        %v918 = vsel %vm362, %v898, 0
        %v921 = vsel %vm362, %v900, 0
        %v924 = vsel %vm362, %v902, 0
        %v927 = vsel %vm362, %v904, 0
        %v930 = vsel %vm362, %v906, 0
        %v933 = vsel %vm362, %v908, 0
        %v936 = vsel %vm362, %v910, 0
        %938 = vmatprep.subr.bf16.mxu0 0
        %939 = vmatpush1.bf16.xpose.msra.mxu0 %v936
        %940 = vmatprep.subr.bf16.mxu0 0
        %941 = vmatpush1.bf16.xpose.msra.mxu0 %v933
        %942 = vmatprep.subr.bf16.mxu0 0
        %943 = vmatpush1.bf16.xpose.msra.mxu0 %v930
        %944 = vmatprep.subr.bf16.mxu0 0
        %945 = vmatpush1.bf16.xpose.msra.mxu0 %v927
        %946 = vmatprep.subr.bf16.mxu0 0
        %947 = vmatpush1.bf16.xpose.msra.mxu0 %v924
        %948 = vmatprep.subr.bf16.mxu0 0
        %949 = vmatpush1.bf16.xpose.msra.mxu0 %v921
        %950 = vmatprep.subr.bf16.mxu0 0
        %951 = vmatpush1.bf16.xpose.msra.mxu0 %v918
        %952 = vmatprep.subr.bf16.mxu0 0
        %953 = vmatpush1.bf16.xpose.msra.mxu0 %v915
        %954 = vmatprep.subr.bf16.mxu0 0
        %955 = vmatpush2.bf16.xpose.msra.mxu0 0
        %956 = vmatprep.subr.bf16.mxu0 0
        %957 = vmatpush2.bf16.xpose.msra.mxu0 0
        %958 = vmatprep.subr.bf16.mxu0 0
        %959 = vmatpush2.bf16.xpose.msra.mxu0 0
        %960 = vmatprep.subr.bf16.mxu0 0
        %961 = vmatpush2.bf16.xpose.msra.mxu0 0
        %962 = vmatprep.subr.bf16.mxu0 0
        %963 = vmatpush2.bf16.xpose.msra.mxu0 0
        %964 = vmatprep.subr.bf16.mxu0 0
        %965 = vmatpush2.bf16.xpose.msra.mxu0 0
        %966 = vmatprep.subr.bf16.mxu0 0
        %967 = vmatpush2.bf16.xpose.msra.mxu0 0
        %968 = vmatprep.subr.bf16.mxu0 0
        %969 = vmatpush2.bf16.xpose.msra.mxu0 0
        %970 = vmatprep.mubr.bf16.mxu0 0
        %971 = vmatmul.mubr.bf16.gmra.mxu0 %v912
        %v972 = vpop.f32.mrf.mxu0
        %v973 = vadd.f32 0.0, %v972
        %v974 = vpop.f32.mrf.mxu0
        %v975 = vpop.f32.mrf.mxu0
        %v976 = vpop.f32.mrf.mxu0
        %977 = vdwg.mxu0
        %v978 = vsel %vm288, %v973, -1e+30
        %979 = vmax.xlane.f32.xlu0 %v978
        %v980 = vpop.xlane.xlu0 %979
        %v981 = vsub.f32 %v978, %v980
        %v982 = vmul.f32 %v981, 1.442695
        %v983 = vpow.pop %v982
        %984 = vadd.xlane.f32.xlu0 %v983
        %v985 = vpop.xlane.xlu0 %984
        %v986 = vpack.c.bf16 %v983, %v983
        %v1003 = vunpack.c.l.b16 %v834
        %v1004 = vunpack.c.l.b16 %v835
        %v1005 = vunpack.c.l.b16 %v836
        %v1006 = vunpack.c.l.b16 %v837
        %v1007 = vunpack.c.l.b16 %v838
        %v1008 = vunpack.c.l.b16 %v839
        %v1009 = vunpack.c.l.b16 %v840
        %v1010 = vunpack.c.l.b16 %v841
        %v1011 = vunpack.c.l.b16 %v842
        %v1012 = vunpack.c.l.b16 %v843
        %v1013 = vunpack.c.l.b16 %v844
        %v1014 = vunpack.c.l.b16 %v845
        %v1015 = vunpack.c.l.b16 %v846
        %v1016 = vunpack.c.l.b16 %v847
        %v1017 = vunpack.c.l.b16 %v848
        %v1018 = vunpack.c.l.b16 %v849
        %v1019 = vpack.c.b16 %v1004, %v1003
        %v1020 = vpack.c.b16 %v1006, %v1005
        %v1021 = vpack.c.b16 %v1008, %v1007
        %v1022 = vpack.c.b16 %v1010, %v1009
        %v1023 = vpack.c.b16 %v1012, %v1011
        %v1024 = vpack.c.b16 %v1014, %v1013
        %v1025 = vpack.c.b16 %v1016, %v1015
        %v1026 = vpack.c.b16 %v1018, %v1017
        %1027 = vrot.lane.b32.xlu0 %v1019, 112
        %v1028 = vpop.permute.xlu0 %1027
        %1029 = vrot.lane.b32.xlu0 %v1020, 112
        %v1030 = vpop.permute.xlu0 %1029
        %1031 = vrot.lane.b32.xlu0 %v1021, 112
        %v1032 = vpop.permute.xlu0 %1031
        %1033 = vrot.lane.b32.xlu0 %v1022, 112
        %v1034 = vpop.permute.xlu0 %1033
        %1035 = vrot.lane.b32.xlu0 %v1023, 112
        %v1036 = vpop.permute.xlu0 %1035
        %1037 = vrot.lane.b32.xlu0 %v1024, 112
        %v1038 = vpop.permute.xlu0 %1037
        %1039 = vrot.lane.b32.xlu0 %v1025, 112
        %v1040 = vpop.permute.xlu0 %1039
        %1041 = vrot.lane.b32.xlu0 %v1026, 112
        %v1042 = vpop.permute.xlu0 %1041
        %1051 = vmatprep.subr.bf16.mxu0 0
        %1052 = vmatpush1.bf16.msra.mxu0 %v1042
        %1053 = vmatprep.subr.bf16.mxu0 0
        %1054 = vmatpush1.bf16.msra.mxu0 %v1040
        %1055 = vmatprep.subr.bf16.mxu0 0
        %1056 = vmatpush1.bf16.msra.mxu0 %v1038
        %1057 = vmatprep.subr.bf16.mxu0 0
        %1058 = vmatpush1.bf16.msra.mxu0 %v1036
        %1059 = vmatprep.subr.bf16.mxu0 0
        %1060 = vmatpush1.bf16.msra.mxu0 %v1034
        %1061 = vmatprep.subr.bf16.mxu0 0
        %1062 = vmatpush1.bf16.msra.mxu0 %v1032
        %1063 = vmatprep.subr.bf16.mxu0 0
        %1064 = vmatpush1.bf16.msra.mxu0 %v1030
        %1065 = vmatprep.subr.bf16.mxu0 0
        %1066 = vmatpush1.bf16.msra.mxu0 %v1028
        %1067 = vmatprep.subr.bf16.mxu0 0
        %1068 = vmatpush2.bf16.msra.mxu0 0
        %1069 = vmatprep.subr.bf16.mxu0 0
        %1070 = vmatpush2.bf16.msra.mxu0 0
        %1071 = vmatprep.subr.bf16.mxu0 0
        %1072 = vmatpush2.bf16.msra.mxu0 0
        %1073 = vmatprep.subr.bf16.mxu0 0
        %1074 = vmatpush2.bf16.msra.mxu0 0
        %1075 = vmatprep.subr.bf16.mxu0 0
        %1076 = vmatpush2.bf16.msra.mxu0 0
        %1077 = vmatprep.subr.bf16.mxu0 0
        %1078 = vmatpush2.bf16.msra.mxu0 0
        %1079 = vmatprep.subr.bf16.mxu0 0
        %1080 = vmatpush2.bf16.msra.mxu0 0
        %1081 = vmatprep.subr.bf16.mxu0 0
        %1082 = vmatpush2.bf16.msra.mxu0 0
        %1083 = vmatprep.mubr.bf16.mxu0 0
        %1084 = vmatmul.mubr.bf16.gmra.mxu0 %v986
        %v1085 = vpop.f32.mrf.mxu0
        %v1086 = vadd.f32 0.0, %v1085
        %v1087 = vpop.f32.mrf.mxu0
        %v1088 = vpop.f32.mrf.mxu0
        %v1089 = vpop.f32.mrf.mxu0
        %1090 = vdwg.mxu0
        %v1091 = vrcp.pop %v985
        %v1092 = vmul.f32 %v1086, %v1091
        %v1093 = vpack.c.bf16 %v1092, %v1092
        %v1095 = vunpack.c.l.b16 %v1093
        %v1096 = vpack.c.b16 %v1095, %v1095
        %1097 = vrot.lane.b32.xlu0 %v1096, 16
        %v1098 = vpop.permute.xlu0 %1097
        %vm1100 = vcmask 191616
        %1101 = vst.msk [vmem:[#allocation2] sm:$0xf] %vm1100, %v1098
        %v1102 = vld [vmem:[%s274] sm:$0xf]
        %v1103 = vld [vmem:[%s279] sm:$0xf]
        %v1104 = vld [vmem:[%s279 + $0x4] sm:$0xf]
        %v1105 = vld [vmem:[%s279 + $0x8] sm:$0xf]
        %v1106 = vld [vmem:[%s279 + $0xc] sm:$0xf]
        %v1107 = vld [vmem:[%s279 + $0x10] sm:$0xf]
        %v1108 = vld [vmem:[%s279 + $0x14] sm:$0xf]
        %v1109 = vld [vmem:[%s279 + $0x18] sm:$0xf]
        %v1110 = vld [vmem:[%s279 + $0x1c] sm:$0xf]
        %v1111 = vld [vmem:[%s279 + $0x20] sm:$0xf]
        %v1112 = vld [vmem:[%s279 + $0x24] sm:$0xf]
        %v1113 = vld [vmem:[%s279 + $0x28] sm:$0xf]
        %v1114 = vld [vmem:[%s279 + $0x2c] sm:$0xf]
        %v1115 = vld [vmem:[%s279 + $0x30] sm:$0xf]
        %v1116 = vld [vmem:[%s279 + $0x34] sm:$0xf]
        %v1117 = vld [vmem:[%s279 + $0x38] sm:$0xf]
        %v1118 = vld [vmem:[%s279 + $0x3c] sm:$0xf]
        %v1119 = vld [vmem:[%s284] sm:$0xf]
        %v1120 = vld [vmem:[%s284 + $0x4] sm:$0xf]
        %v1121 = vld [vmem:[%s284 + $0x8] sm:$0xf]
        %v1122 = vld [vmem:[%s284 + $0xc] sm:$0xf]
        %v1123 = vld [vmem:[%s284 + $0x10] sm:$0xf]
        %v1124 = vld [vmem:[%s284 + $0x14] sm:$0xf]
        %v1125 = vld [vmem:[%s284 + $0x18] sm:$0xf]
        %v1126 = vld [vmem:[%s284 + $0x1c] sm:$0xf]
        %v1127 = vld [vmem:[%s284 + $0x20] sm:$0xf]
        %v1128 = vld [vmem:[%s284 + $0x24] sm:$0xf]
        %v1129 = vld [vmem:[%s284 + $0x28] sm:$0xf]
        %v1130 = vld [vmem:[%s284 + $0x2c] sm:$0xf]
        %v1131 = vld [vmem:[%s284 + $0x30] sm:$0xf]
        %v1132 = vld [vmem:[%s284 + $0x34] sm:$0xf]
        %v1133 = vld [vmem:[%s284 + $0x38] sm:$0xf]
        %v1134 = vld [vmem:[%s284 + $0x3c] sm:$0xf]
        %v1136 = vunpack.c.l.b16 %v1102
        %v1137 = vpack.c.b16 %v1136, %v1136
        %1138 = vrot.lane.b32.xlu0 %v1137, 104
        %v1139 = vpop.permute.xlu0 %1138
        %v1156 = vunpack.c.l.b16 %v1103
        %v1157 = vunpack.c.l.b16 %v1104
        %v1158 = vunpack.c.l.b16 %v1105
        %v1159 = vunpack.c.l.b16 %v1106
        %v1160 = vunpack.c.l.b16 %v1107
        %v1161 = vunpack.c.l.b16 %v1108
        %v1162 = vunpack.c.l.b16 %v1109
        %v1163 = vunpack.c.l.b16 %v1110
        %v1164 = vunpack.c.l.b16 %v1111
        %v1165 = vunpack.c.l.b16 %v1112
        %v1166 = vunpack.c.l.b16 %v1113
        %v1167 = vunpack.c.l.b16 %v1114
        %v1168 = vunpack.c.l.b16 %v1115
        %v1169 = vunpack.c.l.b16 %v1116
        %v1170 = vunpack.c.l.b16 %v1117
        %v1171 = vunpack.c.l.b16 %v1118
        %v1172 = vpack.c.b16 %v1157, %v1156
        %v1173 = vpack.c.b16 %v1159, %v1158
        %v1174 = vpack.c.b16 %v1161, %v1160
        %v1175 = vpack.c.b16 %v1163, %v1162
        %v1176 = vpack.c.b16 %v1165, %v1164
        %v1177 = vpack.c.b16 %v1167, %v1166
        %v1178 = vpack.c.b16 %v1169, %v1168
        %v1179 = vpack.c.b16 %v1171, %v1170
        %1180 = vrot.lane.b32.xlu0 %v1172, 104
        %v1181 = vpop.permute.xlu0 %1180
        %1182 = vrot.lane.b32.xlu0 %v1173, 104
        %v1183 = vpop.permute.xlu0 %1182
        %1184 = vrot.lane.b32.xlu0 %v1174, 104
        %v1185 = vpop.permute.xlu0 %1184
        %1186 = vrot.lane.b32.xlu0 %v1175, 104
        %v1187 = vpop.permute.xlu0 %1186
        %1188 = vrot.lane.b32.xlu0 %v1176, 104
        %v1189 = vpop.permute.xlu0 %1188
        %1190 = vrot.lane.b32.xlu0 %v1177, 104
        %v1191 = vpop.permute.xlu0 %1190
        %1192 = vrot.lane.b32.xlu0 %v1178, 104
        %v1193 = vpop.permute.xlu0 %1192
        %1194 = vrot.lane.b32.xlu0 %v1179, 104
        %v1195 = vpop.permute.xlu0 %1194
        %v1197 = vsel %vm362, %v1139, 0
        %v1200 = vsel %vm362, %v1181, 0
        %v1203 = vsel %vm362, %v1183, 0
        %v1206 = vsel %vm362, %v1185, 0
        %v1209 = vsel %vm362, %v1187, 0
        %v1212 = vsel %vm362, %v1189, 0
        %v1215 = vsel %vm362, %v1191, 0
        %v1218 = vsel %vm362, %v1193, 0
        %v1221 = vsel %vm362, %v1195, 0
        %1223 = vmatprep.subr.bf16.mxu0 0
        %1224 = vmatpush1.bf16.xpose.msra.mxu0 %v1221
        %1225 = vmatprep.subr.bf16.mxu0 0
        %1226 = vmatpush1.bf16.xpose.msra.mxu0 %v1218
        %1227 = vmatprep.subr.bf16.mxu0 0
        %1228 = vmatpush1.bf16.xpose.msra.mxu0 %v1215
        %1229 = vmatprep.subr.bf16.mxu0 0
        %1230 = vmatpush1.bf16.xpose.msra.mxu0 %v1212
        %1231 = vmatprep.subr.bf16.mxu0 0
        %1232 = vmatpush1.bf16.xpose.msra.mxu0 %v1209
        %1233 = vmatprep.subr.bf16.mxu0 0
        %1234 = vmatpush1.bf16.xpose.msra.mxu0 %v1206
        %1235 = vmatprep.subr.bf16.mxu0 0
        %1236 = vmatpush1.bf16.xpose.msra.mxu0 %v1203
        %1237 = vmatprep.subr.bf16.mxu0 0
        %1238 = vmatpush1.bf16.xpose.msra.mxu0 %v1200
        %1239 = vmatprep.subr.bf16.mxu0 0
        %1240 = vmatpush2.bf16.xpose.msra.mxu0 0
        %1241 = vmatprep.subr.bf16.mxu0 0
        %1242 = vmatpush2.bf16.xpose.msra.mxu0 0
        %1243 = vmatprep.subr.bf16.mxu0 0
        %1244 = vmatpush2.bf16.xpose.msra.mxu0 0
        %1245 = vmatprep.subr.bf16.mxu0 0
        %1246 = vmatpush2.bf16.xpose.msra.mxu0 0
        %1247 = vmatprep.subr.bf16.mxu0 0
        %1248 = vmatpush2.bf16.xpose.msra.mxu0 0
        %1249 = vmatprep.subr.bf16.mxu0 0
        %1250 = vmatpush2.bf16.xpose.msra.mxu0 0
        %1251 = vmatprep.subr.bf16.mxu0 0
        %1252 = vmatpush2.bf16.xpose.msra.mxu0 0
        %1253 = vmatprep.subr.bf16.mxu0 0
        %1254 = vmatpush2.bf16.xpose.msra.mxu0 0
        %1255 = vmatprep.mubr.bf16.mxu0 0
        %1256 = vmatmul.mubr.bf16.gmra.mxu0 %v1197
        %v1257 = vpop.f32.mrf.mxu0
        %v1258 = vadd.f32 0.0, %v1257
        %v1259 = vpop.f32.mrf.mxu0
        %v1260 = vpop.f32.mrf.mxu0
        %v1261 = vpop.f32.mrf.mxu0
        %1262 = vdwg.mxu0
        %v1263 = vsel %vm288, %v1258, -1e+30
        %1264 = vmax.xlane.f32.xlu0 %v1263
        %v1265 = vpop.xlane.xlu0 %1264
        %v1266 = vsub.f32 %v1263, %v1265
        %v1267 = vmul.f32 %v1266, 1.442695
        %v1268 = vpow.pop %v1267
        %1269 = vadd.xlane.f32.xlu0 %v1268
        %v1270 = vpop.xlane.xlu0 %1269
        %v1271 = vpack.c.bf16 %v1268, %v1268
        %v1288 = vunpack.c.l.b16 %v1119
        %v1289 = vunpack.c.l.b16 %v1120
        %v1290 = vunpack.c.l.b16 %v1121
        %v1291 = vunpack.c.l.b16 %v1122
        %v1292 = vunpack.c.l.b16 %v1123
        %v1293 = vunpack.c.l.b16 %v1124
        %v1294 = vunpack.c.l.b16 %v1125
        %v1295 = vunpack.c.l.b16 %v1126
        %v1296 = vunpack.c.l.b16 %v1127
        %v1297 = vunpack.c.l.b16 %v1128
        %v1298 = vunpack.c.l.b16 %v1129
        %v1299 = vunpack.c.l.b16 %v1130
        %v1300 = vunpack.c.l.b16 %v1131
        %v1301 = vunpack.c.l.b16 %v1132
        %v1302 = vunpack.c.l.b16 %v1133
        %v1303 = vunpack.c.l.b16 %v1134
        %v1304 = vpack.c.b16 %v1289, %v1288
        %v1305 = vpack.c.b16 %v1291, %v1290
        %v1306 = vpack.c.b16 %v1293, %v1292
        %v1307 = vpack.c.b16 %v1295, %v1294
        %v1308 = vpack.c.b16 %v1297, %v1296
        %v1309 = vpack.c.b16 %v1299, %v1298
        %v1310 = vpack.c.b16 %v1301, %v1300
        %v1311 = vpack.c.b16 %v1303, %v1302
        %1312 = vrot.lane.b32.xlu0 %v1304, 104
        %v1313 = vpop.permute.xlu0 %1312
        %1314 = vrot.lane.b32.xlu0 %v1305, 104
        %v1315 = vpop.permute.xlu0 %1314
        %1316 = vrot.lane.b32.xlu0 %v1306, 104
        %v1317 = vpop.permute.xlu0 %1316
        %1318 = vrot.lane.b32.xlu0 %v1307, 104
        %v1319 = vpop.permute.xlu0 %1318
        %1320 = vrot.lane.b32.xlu0 %v1308, 104
        %v1321 = vpop.permute.xlu0 %1320
        %1322 = vrot.lane.b32.xlu0 %v1309, 104
        %v1323 = vpop.permute.xlu0 %1322
        %1324 = vrot.lane.b32.xlu0 %v1310, 104
        %v1325 = vpop.permute.xlu0 %1324
        %1326 = vrot.lane.b32.xlu0 %v1311, 104
        %v1327 = vpop.permute.xlu0 %1326
        %1336 = vmatprep.subr.bf16.mxu0 0
        %1337 = vmatpush1.bf16.msra.mxu0 %v1327
        %1338 = vmatprep.subr.bf16.mxu0 0
        %1339 = vmatpush1.bf16.msra.mxu0 %v1325
        %1340 = vmatprep.subr.bf16.mxu0 0
        %1341 = vmatpush1.bf16.msra.mxu0 %v1323
        %1342 = vmatprep.subr.bf16.mxu0 0
        %1343 = vmatpush1.bf16.msra.mxu0 %v1321
        %1344 = vmatprep.subr.bf16.mxu0 0
        %1345 = vmatpush1.bf16.msra.mxu0 %v1319
        %1346 = vmatprep.subr.bf16.mxu0 0
        %1347 = vmatpush1.bf16.msra.mxu0 %v1317
        %1348 = vmatprep.subr.bf16.mxu0 0
        %1349 = vmatpush1.bf16.msra.mxu0 %v1315
        %1350 = vmatprep.subr.bf16.mxu0 0
        %1351 = vmatpush1.bf16.msra.mxu0 %v1313
        %1352 = vmatprep.subr.bf16.mxu0 0
        %1353 = vmatpush2.bf16.msra.mxu0 0
        %1354 = vmatprep.subr.bf16.mxu0 0
        %1355 = vmatpush2.bf16.msra.mxu0 0
        %1356 = vmatprep.subr.bf16.mxu0 0
        %1357 = vmatpush2.bf16.msra.mxu0 0
        %1358 = vmatprep.subr.bf16.mxu0 0
        %1359 = vmatpush2.bf16.msra.mxu0 0
        %1360 = vmatprep.subr.bf16.mxu0 0
        %1361 = vmatpush2.bf16.msra.mxu0 0
        %1362 = vmatprep.subr.bf16.mxu0 0
        %1363 = vmatpush2.bf16.msra.mxu0 0
        %1364 = vmatprep.subr.bf16.mxu0 0
        %1365 = vmatpush2.bf16.msra.mxu0 0
        %1366 = vmatprep.subr.bf16.mxu0 0
        %1367 = vmatpush2.bf16.msra.mxu0 0
        %1368 = vmatprep.mubr.bf16.mxu0 0
        %1369 = vmatmul.mubr.bf16.gmra.mxu0 %v1271
        %v1370 = vpop.f32.mrf.mxu0
        %v1371 = vadd.f32 0.0, %v1370
        %v1372 = vpop.f32.mrf.mxu0
        %v1373 = vpop.f32.mrf.mxu0
        %v1374 = vpop.f32.mrf.mxu0
        %1375 = vdwg.mxu0
        %v1376 = vrcp.pop %v1270
        %v1377 = vmul.f32 %v1371, %v1376
        %v1378 = vpack.c.bf16 %v1377, %v1377
        %v1380 = vunpack.c.l.b16 %v1378
        %v1381 = vpack.c.b16 %v1380, %v1380
        %1382 = vrot.lane.b32.xlu0 %v1381, 24
        %v1383 = vpop.permute.xlu0 %1382
        %vm1385 = vcmask 257216
        %1386 = vst.msk [vmem:[#allocation2] sm:$0xf] %vm1385, %v1383
        %v1387 = vld [vmem:[#allocation2] sm:$0xf]
        %v1388 = vld [vmem:[%s3] sm:$0xf]
        %v1389 = vld [vmem:[%s3 + $0x4] sm:$0xf]
        %v1390 = vld [vmem:[%s3 + $0x8] sm:$0xf]
        %v1391 = vld [vmem:[%s3 + $0xc] sm:$0xf]
        %v1392 = vld [vmem:[%s4] sm:$0x1]
        %v1394 = vlaneseq
        %v1395 = vshrl.u32 %v1394, 7
        %v1396 = vsub.s32 0, %v1395
        %v1397 = vrot.slane %v1392, %v1396
        %v1403 = vunpack.c.l.b16 %v1388
        %v1404 = vunpack.c.l.b16 %v1389
        %v1405 = vunpack.c.l.b16 %v1390
        %v1406 = vunpack.c.l.b16 %v1391
        %v1407 = vpack.c.b16 %v1404, %v1403
        %v1408 = vpack.c.b16 %v1406, %v1405
        %vm1411 = vcmask 261120
        %v1413 = vsel %vm1411, %v1387, 0
        %1415 = vmatprep.subr.bf16.mxu0 0
        %1416 = vmatpush1.bf16.msra.mxu0 0
        %1417 = vmatprep.subr.bf16.mxu0 0
        %1418 = vmatpush1.bf16.msra.mxu0 0
        %1419 = vmatprep.subr.bf16.mxu0 0
        %1420 = vmatpush1.bf16.msra.mxu0 0
        %1421 = vmatprep.subr.bf16.mxu0 0
        %1422 = vmatpush1.bf16.msra.mxu0 0
        %1423 = vmatprep.subr.bf16.mxu0 0
        %1424 = vmatpush1.bf16.msra.mxu0 0
        %1425 = vmatprep.subr.bf16.mxu0 0
        %1426 = vmatpush1.bf16.msra.mxu0 0
        %1427 = vmatprep.subr.bf16.mxu0 0
        %1428 = vmatpush1.bf16.msra.mxu0 %v1408
        %1429 = vmatprep.subr.bf16.mxu0 0
        %1430 = vmatpush1.bf16.msra.mxu0 %v1407
        %1431 = vmatprep.subr.bf16.mxu0 0
        %1432 = vmatpush2.bf16.msra.mxu0 0
        %1433 = vmatprep.subr.bf16.mxu0 0
        %1434 = vmatpush2.bf16.msra.mxu0 0
        %1435 = vmatprep.subr.bf16.mxu0 0
        %1436 = vmatpush2.bf16.msra.mxu0 0
        %1437 = vmatprep.subr.bf16.mxu0 0
        %1438 = vmatpush2.bf16.msra.mxu0 0
        %1439 = vmatprep.subr.bf16.mxu0 0
        %1440 = vmatpush2.bf16.msra.mxu0 0
        %1441 = vmatprep.subr.bf16.mxu0 0
        %1442 = vmatpush2.bf16.msra.mxu0 0
        %1443 = vmatprep.subr.bf16.mxu0 0
        %1444 = vmatpush2.bf16.msra.mxu0 0
        %1445 = vmatprep.subr.bf16.mxu0 0
        %1446 = vmatpush2.bf16.msra.mxu0 0
        %1447 = vmatprep.mubr.bf16.mxu0 0
        %1448 = vmatmul.mubr.bf16.gmra.mxu0 %v1413
        %v1449 = vpop.f32.mrf.mxu0
        %v1450 = vadd.f32 %v1397, %v1449
        %v1451 = vpop.f32.mrf.mxu0
        %v1452 = vpop.f32.mrf.mxu0
        %v1453 = vpop.f32.mrf.mxu0
        %1454 = vdwg.mxu0
        %1455 = vst.msk [vmem:[%s267] sm:$0xff] %vm1411, %v1450
        %s1456 = sand.u32 %s163, 1
        %s1457 = scalar_lea.sflag [#allocation4], %s1456
        %s1458 = sand.u32 %s163, 1
        %s1459 = smul.addr %s1458, 8
        %s1460 = scalar_lea.vmem [#allocation3], %s1459
        // Predicated region
        $region41: #{tpu_custom_call.1} parent=39 // pred_check
          %p1461 = pneg %p173
        $region42: #{tpu_custom_call.1} parent=39 // pred_check_branch
          %1463 = sbr.rel (%p1461) target = $region44
        $region43: #{tpu_custom_call.1} parent=39 // pred_region
          %s1465 = ssub.s32 128, 128
          %1466 = vsyncadd %s1457, %s1465
          %s1467 = sadd.s32 %s24, %s23
          %s1468 = smul.addr %s1467, 128
          %s1469 = scalar_lea.hbm %s5, %s1468
          %s1471 = sshll.u32 %s1460, 4
          %s1472 = int_to_ptr.vmem [resolvable:$true] %s1471
          %1474 = dma.vmem_to_hbm [thread:$0]  %s1472, 128, %s1469, %s1457
        $region44: #{tpu_custom_call.1} parent=39 // pred_fallthru
          _
      $region40: #{tpu_custom_call.1} parent=5 // pred_fallthru
        _
      %p1475 = scmp.le.s32.totalorder 2, %s14
      // Predicated region
      $region45: #{tpu_custom_call.1} parent=5 // pred_check
        %p1476 = pneg %p1475
      $region46: #{tpu_custom_call.1} parent=5 // pred_check_branch
        %1478 = sbr.rel (%p1476) target = $region48
      $region47: #{tpu_custom_call.1} parent=5 // pred_region
        %s1479 = ssub.s32 %s14, 2
        // Predicated region
        $region49: #{tpu_custom_call.1} parent=47 // pred_check
          %p1480 = pneg %p179
        $region50: #{tpu_custom_call.1} parent=47 // pred_check_branch
          %1482 = sbr.rel (%p1480) target = $region52
        $region51: #{tpu_custom_call.1} parent=47 // pred_region
          %s1483 = sand.u32 %s164, 1
          %s1484 = scalar_lea.sflag [#allocation4], %s1483
          %s1485 = sand.u32 %s164, 1
          %s1486 = smul.addr %s1485, 8
          %s1487 = scalar_lea.vmem [#allocation3], %s1486
          %1488 = dma.done %s1484, 128
        $region52: #{tpu_custom_call.1} parent=47 // pred_fallthru
          _
      $region48: #{tpu_custom_call.1} parent=5 // pred_fallthru
        _
    $region6: #{tpu_custom_call.1} parent=1 // loop_footer
      %s18 = sadd.s32 1, %s14
    $region7: #{tpu_custom_call.1} parent=1 // loop_footer_branch
      %13 = sbr.rel target = $region3
    $region8: #{tpu_custom_call.1} parent=1 // loop_exit
      _
    %1489 = vsyncpa [#allocation4], 1
    %s1490 = scalar_lea.sflag [#allocation4], 1
    %1491 = vsyncpa %s1490, 1

</llo_original>
